<compile_context>
chip_gen: v7x
topology: tpu7x:2x2x1
jax: 0.10.0
libtpu: 0.0.40
codegen_flags: <defaults>
</compile_context>

<pallas_src>
import math
import functools

import jax
import jax.numpy as jnp
from jax.experimental import pallas as pl
from jax.experimental.pallas import tpu as pltpu


def _curricularface_kernel(stats_ref, xn_ref, w_ref, out_ref, inv_w_ref, *, s):
    """Computes one (tb, tc) logits tile.

    stats_ref : (tb, 4) f32   packed per-row [label, cos(th_t+m), final_t, t_new]
    xn_ref    : (tb, D)       row-normalized features, in the weight dtype
    w_ref     : (tc, D)       raw (un-normalized) class-weight tile
    out_ref   : (tb, tc)      logits tile
    inv_w_ref : (1, tc) f32   scratch: cached per-class inverse weight norms
    """
    c = pl.program_id(0)            # class-tile index (outer, "parallel")
    b = pl.program_id(1)            # batch-tile index (inner, "arbitrary")
    tc = w_ref.shape[0]

    # Per-class inverse norms depend only on the class tile: compute once per
    # class tile (first batch step) and reuse across the inner batch loop.
    @pl.when(b == 0)
    def _():
        w32 = w_ref[...].astype(jnp.float32)
        # Row squared-norms as a lane-major (1, tc) vector via the MXU
        # (ones @ (w*w).T): avoids an XLU lane reduction + relayout.
        sq = jax.lax.dot_general(
            jnp.ones((1, w32.shape[1]), jnp.float32), w32 * w32,
            dimension_numbers=(((1,), (1,)), ((), ())),
            preferred_element_type=jnp.float32)                 # (1, tc)
        inv_w_ref[...] = jax.lax.rsqrt(jnp.maximum(sq, 1e-24))

    # Raw weight tile straight to the MXU (bf16 stays bf16: full MXU rate).
    cos = jax.lax.dot_general(
        xn_ref[...], w_ref[...],
        dimension_numbers=(((1,), (1,)), ((), ())),             # xn @ w.T
        preferred_element_type=jnp.float32)                     # (tb, tc) f32
    # Post-matmul per-class scaling: tb*tc multiplies instead of tc*D.
    cos = jnp.clip(cos * inv_w_ref[...], -1.0, 1.0)

    stats = stats_ref[...]                                      # (tb, 4)
    labels = stats[:, 0:1].astype(jnp.int32)                    # (tb, 1)
    tcm = stats[:, 1:2]                                         # cos(theta_t + m)
    ftcm = stats[:, 2:3]                                        # target-col value
    t = stats[:, 3:4]                                           # updated EMA t

    tb = cos.shape[0]
    cls_idx = c * tc + jax.lax.broadcasted_iota(jnp.int32, (tb, tc), 1)
    is_target = labels == cls_idx

    hard = cos * (t + cos)                                      # hard-example mod
    modulated = jnp.where(cos > tcm, hard, cos)
    out = jnp.where(is_target, ftcm, modulated)
    out_ref[...] = (s * out).astype(out_ref.dtype)


def _vmem_budget_bytes():
    """Per-core VMEM capacity with ~25% headroom for Mosaic internal scratch."""
    try:
        cap = int(pltpu.get_tpu_info().vmem_capacity_bytes)
    except Exception:
        cap = 64 << 20          # conservative (v7x-sized) fallback
    return (cap * 3) // 4       # 48 MiB on v7x, 96 MiB on v5e/v6e


def _est_vmem_bytes(tc, tb, D, wbytes, xbytes, obytes):
    return (2 * tc * D * wbytes        # double-buffered weight tile
            + 2 * tb * D * xbytes      # normalized features (double-buffered)
            + 2 * tb * 128 * 4         # packed per-row stats (lane-padded)
            + 2 * tb * tc * obytes     # output double buffer
            + 2 * tc * D * 4           # one-shot f32 upcast + square temporaries
            + 2 * tb * tc * 4          # cos + elementwise f32 temporaries
            + 8 * max(tc, 128) * 4)    # inv-norm scratch (sublane-padded) + slack


def _select_tiles(B, C, D, wbytes, xbytes, obytes, budget):
    # Batch tile: keep the normalized features fully resident when possible
    # (tb == B); otherwise the largest power-of-two divisor.
    if B <= 1024:
        tb = B
    else:
        tb = B
        for cand in (1024, 512, 256, 128, 64, 32, 16, 8):
            if B % cand == 0:
                tb = cand
                break

    # Class tile: multiples of 256 preferred (MXU 256^2 on v6e/v7x), largest
    # that fits the VMEM budget.
    tc_cands = [c for c in (2048, 1024, 512, 256, 128) if C % c == 0] or [C]
    while True:
        for cand in tc_cands:
            if _est_vmem_bytes(cand, tb, D, wbytes, xbytes, obytes) <= budget:
                return cand, tb
        smaller = [c for c in (512, 256, 128, 64, 32, 16, 8)
                   if c < tb and B % c == 0]
        if not smaller:
            raise ValueError(
                f"CurricularFace kernel tiles do not fit the VMEM budget "
                f"({budget} bytes); reduce the class/batch tile sizes.")
        tb = smaller[0]


def curricularface_head(features, labels, weight, t, *, s, m,
                        tc=None, tb=None, out_dtype=jnp.float32):
    """CurricularFace head forward.

    features: (B, D) float
    labels:   (B,)   int
    weight:   (C, D) float (f32 or bf16; bf16 halves weight HBM streaming)
    t:        scalar or (1,) float -- the EMA buffer
    returns:  (logits (B, C) in `out_dtype`, t_new (1,) f32)
    """
    B, D = features.shape
    C, D2 = weight.shape
    assert D2 == D

    cos_m = math.cos(m)
    sin_m = math.sin(m)
    th = math.cos(math.pi - m)
    mm = math.sin(math.pi - m) * m

    f32 = jnp.float32
    feats = features.astype(f32)

    # ---- hoisted O(B*D) prologue (computed once, not per class tile) -------
    xn = feats * jax.lax.rsqrt(
        jnp.maximum(jnp.sum(feats * feats, axis=-1, keepdims=True), 1e-24))

    labels_i32 = labels.astype(jnp.int32)
    # NOTE: target_cos is recomputed from a gathered weight row rather than
    # read back from the kernel's clipped cos; divergence near the clip
    # boundary is at f32 rounding level (covered by tolerance).
    wl = jnp.take(weight, labels_i32, axis=0).astype(f32)          # (B, D)
    wln = wl * jax.lax.rsqrt(
        jnp.maximum(jnp.sum(wl * wl, axis=-1, keepdims=True), 1e-24))
    target_cos = jnp.clip(
        jnp.sum(xn * wln, axis=-1, keepdims=True), -1.0, 1.0)      # (B, 1)

    sin_theta = jnp.sqrt(jnp.maximum(1.0 - target_cos * target_cos, 0.0))
    tcm = target_cos * cos_m - sin_theta * sin_m                   # cos(th + m)
    ftcm = jnp.where(target_cos > th, tcm, target_cos - mm)        # (B, 1)

    t_prev = jnp.reshape(jnp.asarray(t, f32), ())
    t_new = jnp.mean(target_cos) * 0.01 + 0.99 * t_prev

    # One packed (B, 4) per-row stats array -> a single narrow DMA per batch
    # tile instead of four separate lane-dim-1 blocks.  (Labels are exactly
    # representable in f32 for any realistic class count.)
    stats = jnp.concatenate(
        [labels_i32.astype(f32).reshape(B, 1), tcm, ftcm,
         jnp.full((B, 1), t_new, dtype=f32)], axis=1)              # (B, 4)

    # Feed the MXU matching dtypes (bf16 weights -> bf16 features: also halves
    # the feature stream).
    xn_in = xn if weight.dtype == jnp.float32 else xn.astype(weight.dtype)

    wbytes = weight.dtype.itemsize
    xbytes = xn_in.dtype.itemsize
    obytes = jnp.dtype(out_dtype).itemsize
    budget = _vmem_budget_bytes()

    if tc is None or tb is None:
        tc_sel, tb_sel = _select_tiles(B, C, D, wbytes, xbytes, obytes, budget)
        tc = tc if tc is not None else tc_sel
        tb = tb if tb is not None else tb_sel
    assert C % tc == 0 and B % tb == 0

    est = _est_vmem_bytes(tc, tb, D, wbytes, xbytes, obytes)
    if est > budget:
        raise ValueError(
            f"requested tiles need ~{est} bytes of VMEM (> budget {budget}); "
            f"shrink tc/tb instead of clamping.")

    cost = pl.CostEstimate(
        flops=2 * B * C * D,
        transcendentals=C,                     # per-class rsqrt
        bytes_accessed=(C * D * wbytes + B * D * xbytes
                        + B * C * obytes + B * 4 * 4))

    kernel = functools.partial(_curricularface_kernel, s=float(s))

    logits = pl.pallas_call(
        kernel,
        out_shape=jax.ShapeDtypeStruct((B, C), out_dtype),
        grid=(C // tc, B // tb),                # class outer: every weight
        in_specs=[                              # tile streamed from HBM once
            pl.BlockSpec((tb, 4), lambda c, b: (b, 0)),   # packed row stats
            pl.BlockSpec((tb, D), lambda c, b: (b, 0)),   # normalized feats
            pl.BlockSpec((tc, D), lambda c, b: (c, 0)),   # raw weight tile
        ],
        out_specs=pl.BlockSpec((tb, tc), lambda c, b: (b, c)),
        scratch_shapes=[pltpu.VMEM((1, tc), jnp.float32)],  # cached 1/||w_j||
        compiler_params=pltpu.CompilerParams(
            # batch axis carries the cached class-tile norms -> "arbitrary"
            dimension_semantics=("parallel", "arbitrary"),
            vmem_limit_bytes=int(budget)),
        cost_estimate=cost,
    )(stats, xn_in, weight)

    return logits, jnp.reshape(t_new, (1,))


def curricularface_reference(features, labels, weight, t, *, s, m):
    """Plain-JAX reference mirroring the PyTorch forward."""
    th = math.cos(math.pi - m)
    mm = math.sin(math.pi - m) * m
    B = features.shape[0]
    C = weight.shape[0]

    xn = features / jnp.maximum(
        jnp.linalg.norm(features, axis=1, keepdims=True), 1e-12)
    w32 = weight.astype(jnp.float32)
    wn = w32 / jnp.maximum(jnp.linalg.norm(w32, axis=1, keepdims=True), 1e-12)
    cos = jnp.clip(
        jnp.matmul(xn, wn.T, precision=jax.lax.Precision.HIGHEST), -1.0, 1.0)

    target_cos = cos[jnp.arange(B), labels][:, None]
    target_cos_m = jnp.cos(jnp.arccos(target_cos) + m)
    mask = cos > target_cos_m
    final = jnp.where(target_cos > th, target_cos_m, target_cos - mm)

    t_prev = jnp.reshape(jnp.asarray(t, jnp.float32), ())
    t_new = jnp.mean(target_cos) * 0.01 + 0.99 * t_prev

    hard = cos * (t_new + cos)
    cos_mod = jnp.where(mask, hard, cos)
    one_hot = labels[:, None] == jnp.arange(C)[None, :]
    out = jnp.where(one_hot, final, cos_mod)
    return s * out, jnp.reshape(t_new, (1,))


if __name__ == "__main__":
    # embedding_dim = 128, num_classes = 1024, m = 0.5, s = 64.0
    B, D, C = 8, 128, 1024
    m, s_scale = 0.5, 64.0

    key = jax.random.PRNGKey(0)
    k_feat, k_w, k_lab = jax.random.split(key, 3)

    features = jax.random.normal(k_feat, (B, D), dtype=jnp.float32)
    labels = jax.random.randint(k_lab, (B,), 0, C, dtype=jnp.int32)

    # xavier_uniform_ on weight of shape (num_classes, in_features)
    bound = math.sqrt(6.0 / (C + D))
    weight = jax.random.uniform(k_w, (C, D), dtype=jnp.float32,
                                minval=-bound, maxval=bound)
    t0 = jnp.zeros((1,), dtype=jnp.float32)     # registered buffer `t`

    # ---- f32 path: checked against the plain-JAX reference -----------------
    logits, t_new = curricularface_head(features, labels, weight, t0,
                                        s=s_scale, m=m)
    logits = jax.block_until_ready(logits)

    ref_logits, ref_t = curricularface_reference(features, labels, weight, t0,
                                                 s=s_scale, m=m)
    assert logits.shape == (B, C)
    max_err = float(jnp.max(jnp.abs(logits - ref_logits)))
    assert jnp.allclose(logits, ref_logits, atol=2e-3, rtol=2e-3), (
        f"max abs err = {max_err}")
    assert jnp.allclose(t_new, ref_t, atol=1e-6), "t buffer update mismatch"

    # ---- bf16 weight + bf16 logits path -------------------------------------
    # Halves both the weight stream and the output writeback.  With s = 64 a
    # ~1e-3 bf16 cos error becomes ~0.06 in the logits (and can flip cos>tcm
    # near ties), so only shape/finiteness is asserted here (training-ok).
    logits_bf16, _ = curricularface_head(
        features, labels, weight.astype(jnp.bfloat16), t0,
        s=s_scale, m=m, out_dtype=jnp.bfloat16)
    logits_bf16 = jax.block_until_ready(logits_bf16)
    assert logits_bf16.shape == (B, C)
    assert bool(jnp.all(jnp.isfinite(logits_bf16.astype(jnp.float32))))

    print("KERNEL_OK")
</pallas_src>

<mosaic_0001>
module attributes {stable_mosaic.version = 11 : i64} {
  func.func @_curricularface_kernel(%arg0: i32, %arg1: i32, %arg2: memref<8x4xf32, #tpu.memory_space<vmem>>, %arg3: memref<8x128xf32, #tpu.memory_space<vmem>>, %arg4: memref<1024x128xf32, #tpu.memory_space<vmem>>, %arg5: memref<8x1024xf32, #tpu.memory_space<vmem>>, %arg6: memref<1x1024xf32, #tpu.memory_space<vmem>>) attributes {dimension_semantics = [#tpu.dimension_semantics<parallel>, #tpu.dimension_semantics<arbitrary>], iteration_bounds = array<i64: 1, 1>, scalar_prefetch = 0 : i64, scratch_operands = 1 : i64, tpu.core_type = #tpu.core_type<tc>, window_params = [{transform_indices = @transform_0, window_bounds = array<i64: 8, 4>}, {transform_indices = @transform_1, window_bounds = array<i64: 8, 128>}, {transform_indices = @transform_2, window_bounds = array<i64: 1024, 128>}, {transform_indices = @transform_3, window_bounds = array<i64: 8, 1024>}]} {
    %c0_i32 = arith.constant 0 : i32
    %0 = arith.cmpi eq, %arg1, %c0_i32 : i32
    %1 = arith.extui %0 : i1 to i32
    %c0_i32_0 = arith.constant 0 : i32
    %2 = arith.cmpi ne, %1, %c0_i32_0 : i32
    scf.if %2 {
      %c0_13 = arith.constant 0 : index
      %c0_14 = arith.constant 0 : index
      %37 = vector.load %arg4[%c0_13, %c0_14] : memref<1024x128xf32, #tpu.memory_space<vmem>>, vector<1024x128xf32>
      %cst_15 = arith.constant 1.000000e+00 : f32
      %38 = vector.broadcast %cst_15 : f32 to vector<1x128xf32>
      %39 = arith.mulf %37, %37 : vector<1024x128xf32>
      %cst_16 = arith.constant dense<0.000000e+00> : vector<1x1024xf32>
      %40 = tpu.matmul %38, %39, %cst_16 {dimension_numbers = #tpu.dot_dimension_numbers<[1], [1], [0], [0], [0, 0, 1, 0], [], []>} : vector<1x128xf32>, vector<1024x128xf32>, vector<1x1024xf32> -> vector<1x1024xf32>
      %cst_17 = arith.constant 1.000000e-24 : f32
      %41 = vector.broadcast %cst_17 : f32 to vector<1x1024xf32>
      %42 = arith.maximumf %40, %41 : vector<1x1024xf32>
      %43 = math.rsqrt %42 : vector<1x1024xf32>
      %c0_18 = arith.constant 0 : index
      %c0_19 = arith.constant 0 : index
      %44 = vector.load %arg6[%c0_18, %c0_19] : memref<1x1024xf32, #tpu.memory_space<vmem>>, vector<1x1024xf32>
      tpu.vector_store %arg6[%c0_18, %c0_19], %43 {strides = array<i32>} : memref<1x1024xf32, #tpu.memory_space<vmem>>, vector<1x1024xf32>,
    } else {
    }
    %c0 = arith.constant 0 : index
    %c0_1 = arith.constant 0 : index
    %3 = vector.load %arg3[%c0, %c0_1] : memref<8x128xf32, #tpu.memory_space<vmem>>, vector<8x128xf32>
    %c0_2 = arith.constant 0 : index
    %c0_3 = arith.constant 0 : index
    %4 = vector.load %arg4[%c0_2, %c0_3] : memref<1024x128xf32, #tpu.memory_space<vmem>>, vector<1024x128xf32>
    %cst = arith.constant dense<0.000000e+00> : vector<8x1024xf32>
    %5 = tpu.matmul %3, %4, %cst {dimension_numbers = #tpu.dot_dimension_numbers<[1], [1], [0], [0], [0, 0, 1, 0], [], []>} : vector<8x128xf32>, vector<1024x128xf32>, vector<8x1024xf32> -> vector<8x1024xf32>
    %c0_4 = arith.constant 0 : index
    %c0_5 = arith.constant 0 : index
    %6 = vector.load %arg6[%c0_4, %c0_5] : memref<1x1024xf32, #tpu.memory_space<vmem>>, vector<1x1024xf32>
    %7 = vector.broadcast %6 : vector<1x1024xf32> to vector<8x1024xf32>
    %8 = arith.mulf %5, %7 : vector<8x1024xf32>
    %cst_6 = arith.constant -1.000000e+00 : f32
    %cst_7 = arith.constant 1.000000e+00 : f32
    %9 = vector.broadcast %cst_6 : f32 to vector<8x1024xf32>
    %10 = arith.maximumf %9, %8 : vector<8x1024xf32>
    %11 = vector.broadcast %cst_7 : f32 to vector<8x1024xf32>
    %12 = arith.minimumf %11, %10 : vector<8x1024xf32>
    %c0_8 = arith.constant 0 : index
    %c0_9 = arith.constant 0 : index
    %13 = vector.load %arg2[%c0_8, %c0_9] : memref<8x4xf32, #tpu.memory_space<vmem>>, vector<8x4xf32>
    %14 = vector.extract_strided_slice %13 {offsets = [0, 0], sizes = [8, 1], strides = [1, 1]} : vector<8x4xf32> to vector<8x1xf32>
    %15 = arith.fptosi %14 : vector<8x1xf32> to vector<8x1xi32>
    %16 = vector.extract_strided_slice %13 {offsets = [0, 1], sizes = [8, 1], strides = [1, 1]} : vector<8x4xf32> to vector<8x1xf32>
    %17 = vector.extract_strided_slice %13 {offsets = [0, 2], sizes = [8, 1], strides = [1, 1]} : vector<8x4xf32> to vector<8x1xf32>
    %18 = vector.extract_strided_slice %13 {offsets = [0, 3], sizes = [8, 1], strides = [1, 1]} : vector<8x4xf32> to vector<8x1xf32>
    %c1024_i32 = arith.constant 1024 : i32
    %19 = arith.muli %arg0, %c1024_i32 : i32
    %20 = tpu.iota {dimensions = array<i32: 1>} : vector<8x1024xi32>
    %21 = vector.broadcast %19 : i32 to vector<8x1024xi32>
    %22 = arith.addi %21, %20 : vector<8x1024xi32>
    %23 = vector.broadcast %15 : vector<8x1xi32> to vector<8x1024xi32>
    %24 = arith.cmpi eq, %23, %22 : vector<8x1024xi32>
    %25 = vector.broadcast %18 : vector<8x1xf32> to vector<8x1024xf32>
    %26 = arith.addf %25, %12 : vector<8x1024xf32>
    %27 = arith.mulf %12, %26 : vector<8x1024xf32>
    %28 = vector.broadcast %16 : vector<8x1xf32> to vector<8x1024xf32>
    %29 = arith.cmpf ogt, %12, %28 : vector<8x1024xf32>
    %30 = arith.select %29, %27, %12 : vector<8x1024xi1>, vector<8x1024xf32>
    %31 = vector.shape_cast %17 : vector<8x1xf32> to vector<8x1xf32>
    %32 = vector.broadcast %31 : vector<8x1xf32> to vector<8x1024xf32>
    %33 = arith.select %24, %32, %30 : vector<8x1024xi1>, vector<8x1024xf32>
    %cst_10 = arith.constant 6.400000e+01 : f32
    %34 = vector.broadcast %cst_10 : f32 to vector<8x1024xf32>
    %35 = arith.mulf %34, %33 : vector<8x1024xf32>
    %c0_11 = arith.constant 0 : index
    %c0_12 = arith.constant 0 : index
    %36 = vector.load %arg5[%c0_11, %c0_12] : memref<8x1024xf32, #tpu.memory_space<vmem>>, vector<8x1024xf32>
    tpu.vector_store %arg5[%c0_11, %c0_12], %35 {strides = array<i32>} : memref<8x1024xf32, #tpu.memory_space<vmem>>, vector<8x1024xf32>,
    return
  }
  func.func @transform_0(%arg0: i32, %arg1: i32) -> (i32, i32) {
    %c0_i32 = arith.constant 0 : i32
    %c0_i32_0 = arith.constant 0 : i32
    return %arg1, %c0_i32 : i32, i32
  }
  func.func @transform_1(%arg0: i32, %arg1: i32) -> (i32, i32) {
    %c0_i32 = arith.constant 0 : i32
    %c0_i32_0 = arith.constant 0 : i32
    return %arg1, %c0_i32 : i32, i32
  }
  func.func @transform_2(%arg0: i32, %arg1: i32) -> (i32, i32) {
    %c0_i32 = arith.constant 0 : i32
    %c0_i32_0 = arith.constant 0 : i32
    return %arg0, %c0_i32 : i32, i32
  }
  func.func @transform_3(%arg0: i32, %arg1: i32) -> (i32, i32) {
    %c0_i32 = arith.constant 0 : i32
    return %arg1, %arg0 : i32, i32
  }
}

</mosaic_0001>

<llo_original>
// kernel: tpu_custom_call.1
$region0: #{tpu_custom_call.1}
  #allocation0 [shape = 'u32[]', space=smem, size = 0x4, offset = 0x4, fixed_abs, tag = 'smem constant byte address 0x4 - core index']
  #allocation1 [shape = 'u32[144,128]{1,0:T(1,128)}', space=vmem, size = 0x12000, scoped, tag = 'internal scratch']
  #allocation2 [shape = 'f32[1,1024]{1,0:T(1,128)}', space=vmem, size = 0x1000, scoped, tag = 'scratch operand']
  %s0 = inlined_call_operand.vmem [shape: f32[8,4], index: 0, kind: input, shape index: {}]
  %s1 = inlined_call_operand.vmem [shape: f32[8,128], index: 1, kind: input, shape index: {}]
  %s2 = inlined_call_operand.hbm [shape: f32[1024,128], index: 2, kind: input, shape index: {}]
  %s3 = inlined_call_operand.hbm [shape: f32[8,1024], index: 3, kind: output, shape index: {}]
  %s4 = sld [smem:[#allocation0]]
  $region30: #{tpu_custom_call.1} parent=0
    _
  %s6 = ssub.s32 1, %s4
  %s7 = scalar_select 0, %s6, %s4
  $region1: #{tpu_custom_call.1} parent=0
    #allocation3 [shape = 'u8[524288]{0}', space=vmem, size = 0x80000, scoped, tag = 'input window, operand 2, single buffered']
    #allocation4 [shape = 's32[1]{0}', space=sflag, size = 0x4, scoped, tag = 'scoped memory for tpu_custom_call.1']
    #allocation5 [shape = 's32[1]{0}', space=sflag, size = 0x4, scoped, tag = 'scoped memory for tpu_custom_call.1']
    #allocation6 [shape = 'u8[32768]{0}', space=vmem, size = 0x8000, scoped, tag = 'output window, operand 0, single buffered']
    %8 = vsyncpa [#allocation4], 0
    %9 = vsyncpa [#allocation5], 0
    // Predicated region
    $region2: #{tpu_custom_call.1} parent=1 // pred_check
      _
    $region3: #{tpu_custom_call.1} parent=1 // pred_check_branch
      %11 = sbr.rel (0) target = $region5
    $region4: #{tpu_custom_call.1} parent=1 // pred_region
      _
    $region5: #{tpu_custom_call.1} parent=1 // pred_fallthru
      _
    // Predicated region
    $region6: #{tpu_custom_call.1} parent=1 // pred_check
      _
    $region7: #{tpu_custom_call.1} parent=1 // pred_check_branch
      %13 = sbr.rel (0) target = $region9
    $region8: #{tpu_custom_call.1} parent=1 // pred_region
      _
    $region9: #{tpu_custom_call.1} parent=1 // pred_fallthru
      _
    // Predicated region
    $region10: #{tpu_custom_call.1} parent=1 // pred_check
      _
    $region11: #{tpu_custom_call.1} parent=1 // pred_check_branch
      %15 = sbr.rel (0) target = $region13
    $region12: #{tpu_custom_call.1} parent=1 // pred_region
      %s17 = ssub.s32 16384, 16384
      %18 = vsyncadd [#allocation4], %s17
      %s19 = sshll.u32 [#allocation3], 4
      %s20 = int_to_ptr.vmem [resolvable:$true] %s19
      %25 = dma.hbm_to_vmem [thread:$0]  %s2, 16384, %s20, [#allocation4], 128, 128, 8
    $region13: #{tpu_custom_call.1} parent=1 // pred_fallthru
      _
    // Predicated region
    $region14: #{tpu_custom_call.1} parent=1 // pred_check
      _
    $region15: #{tpu_custom_call.1} parent=1 // pred_check_branch
      %27 = sbr.rel (0) target = $region17
    $region16: #{tpu_custom_call.1} parent=1 // pred_region
      %28 = dma.done [#allocation4], 16384
    $region17: #{tpu_custom_call.1} parent=1 // pred_fallthru
      _
    %p29 = scmp.eq.s32.totalorder 0, 0
    // Predicated region
    $region18: #{tpu_custom_call.1} parent=1 // pred_check
      %p30 = pneg %p29
    $region19: #{tpu_custom_call.1} parent=1 // pred_check_branch
      %32 = sbr.rel (%p30) target = $region21
    $region20: #{tpu_custom_call.1} parent=1 // pred_region
      %v33 = vld [vmem:[#allocation3] sm:$0xff]
      %v34 = vld [vmem:[#allocation3 + $0x8] sm:$0xff]
      %v35 = vld [vmem:[#allocation3 + $0x10] sm:$0xff]
      %v36 = vld [vmem:[#allocation3 + $0x18] sm:$0xff]
      %v37 = vld [vmem:[#allocation3 + $0x20] sm:$0xff]
      %v38 = vld [vmem:[#allocation3 + $0x28] sm:$0xff]
      %v39 = vld [vmem:[#allocation3 + $0x30] sm:$0xff]
      %v40 = vld [vmem:[#allocation3 + $0x38] sm:$0xff]
      %v41 = vld [vmem:[#allocation3 + $0x40] sm:$0xff]
      %v42 = vld [vmem:[#allocation3 + $0x48] sm:$0xff]
      %v43 = vld [vmem:[#allocation3 + $0x50] sm:$0xff]
      %v44 = vld [vmem:[#allocation3 + $0x58] sm:$0xff]
      %v45 = vld [vmem:[#allocation3 + $0x60] sm:$0xff]
      %v46 = vld [vmem:[#allocation3 + $0x68] sm:$0xff]
      %v47 = vld [vmem:[#allocation3 + $0x70] sm:$0xff]
      %v48 = vld [vmem:[#allocation3 + $0x78] sm:$0xff]
      %v49 = vld [vmem:[#allocation3 + $0x80] sm:$0xff]
      %v50 = vld [vmem:[#allocation3 + $0x88] sm:$0xff]
      %v51 = vld [vmem:[#allocation3 + $0x90] sm:$0xff]
      %v52 = vld [vmem:[#allocation3 + $0x98] sm:$0xff]
      %v53 = vld [vmem:[#allocation3 + $0xa0] sm:$0xff]
      %v54 = vld [vmem:[#allocation3 + $0xa8] sm:$0xff]
      %v55 = vld [vmem:[#allocation3 + $0xb0] sm:$0xff]
      %v56 = vld [vmem:[#allocation3 + $0xb8] sm:$0xff]
      %v57 = vld [vmem:[#allocation3 + $0xc0] sm:$0xff]
      %v58 = vld [vmem:[#allocation3 + $0xc8] sm:$0xff]
      %v59 = vld [vmem:[#allocation3 + $0xd0] sm:$0xff]
      %v60 = vld [vmem:[#allocation3 + $0xd8] sm:$0xff]
      %v61 = vld [vmem:[#allocation3 + $0xe0] sm:$0xff]
      %v62 = vld [vmem:[#allocation3 + $0xe8] sm:$0xff]
      %v63 = vld [vmem:[#allocation3 + $0xf0] sm:$0xff]
      %v64 = vld [vmem:[#allocation3 + $0xf8] sm:$0xff]
      %v65 = vld [vmem:[#allocation3 + $0x100] sm:$0xff]
      %v66 = vld [vmem:[#allocation3 + $0x108] sm:$0xff]
      %v67 = vld [vmem:[#allocation3 + $0x110] sm:$0xff]
      %v68 = vld [vmem:[#allocation3 + $0x118] sm:$0xff]
      %v69 = vld [vmem:[#allocation3 + $0x120] sm:$0xff]
      %v70 = vld [vmem:[#allocation3 + $0x128] sm:$0xff]
      %v71 = vld [vmem:[#allocation3 + $0x130] sm:$0xff]
      %v72 = vld [vmem:[#allocation3 + $0x138] sm:$0xff]
      %v73 = vld [vmem:[#allocation3 + $0x140] sm:$0xff]
      %v74 = vld [vmem:[#allocation3 + $0x148] sm:$0xff]
      %v75 = vld [vmem:[#allocation3 + $0x150] sm:$0xff]
      %v76 = vld [vmem:[#allocation3 + $0x158] sm:$0xff]
      %v77 = vld [vmem:[#allocation3 + $0x160] sm:$0xff]
      %v78 = vld [vmem:[#allocation3 + $0x168] sm:$0xff]
      %v79 = vld [vmem:[#allocation3 + $0x170] sm:$0xff]
      %v80 = vld [vmem:[#allocation3 + $0x178] sm:$0xff]
      %v81 = vld [vmem:[#allocation3 + $0x180] sm:$0xff]
      %v82 = vld [vmem:[#allocation3 + $0x188] sm:$0xff]
      %v83 = vld [vmem:[#allocation3 + $0x190] sm:$0xff]
      %v84 = vld [vmem:[#allocation3 + $0x198] sm:$0xff]
      %v85 = vld [vmem:[#allocation3 + $0x1a0] sm:$0xff]
      %v86 = vld [vmem:[#allocation3 + $0x1a8] sm:$0xff]
      %v87 = vld [vmem:[#allocation3 + $0x1b0] sm:$0xff]
      %v88 = vld [vmem:[#allocation3 + $0x1b8] sm:$0xff]
      %v89 = vld [vmem:[#allocation3 + $0x1c0] sm:$0xff]
      %v90 = vld [vmem:[#allocation3 + $0x1c8] sm:$0xff]
      %v91 = vld [vmem:[#allocation3 + $0x1d0] sm:$0xff]
      %v92 = vld [vmem:[#allocation3 + $0x1d8] sm:$0xff]
      %v93 = vld [vmem:[#allocation3 + $0x1e0] sm:$0xff]
      %v94 = vld [vmem:[#allocation3 + $0x1e8] sm:$0xff]
      %v95 = vld [vmem:[#allocation3 + $0x1f0] sm:$0xff]
      %v96 = vld [vmem:[#allocation3 + $0x1f8] sm:$0xff]
      %v97 = vld [vmem:[#allocation3 + $0x200] sm:$0xff]
      %v98 = vld [vmem:[#allocation3 + $0x208] sm:$0xff]
      %v99 = vld [vmem:[#allocation3 + $0x210] sm:$0xff]
      %v100 = vld [vmem:[#allocation3 + $0x218] sm:$0xff]
      %v101 = vld [vmem:[#allocation3 + $0x220] sm:$0xff]
      %v102 = vld [vmem:[#allocation3 + $0x228] sm:$0xff]
      %v103 = vld [vmem:[#allocation3 + $0x230] sm:$0xff]
      %v104 = vld [vmem:[#allocation3 + $0x238] sm:$0xff]
      %v105 = vld [vmem:[#allocation3 + $0x240] sm:$0xff]
      %v106 = vld [vmem:[#allocation3 + $0x248] sm:$0xff]
      %v107 = vld [vmem:[#allocation3 + $0x250] sm:$0xff]
      %v108 = vld [vmem:[#allocation3 + $0x258] sm:$0xff]
      %v109 = vld [vmem:[#allocation3 + $0x260] sm:$0xff]
      %v110 = vld [vmem:[#allocation3 + $0x268] sm:$0xff]
      %v111 = vld [vmem:[#allocation3 + $0x270] sm:$0xff]
      %v112 = vld [vmem:[#allocation3 + $0x278] sm:$0xff]
      %v113 = vld [vmem:[#allocation3 + $0x280] sm:$0xff]
      %v114 = vld [vmem:[#allocation3 + $0x288] sm:$0xff]
      %v115 = vld [vmem:[#allocation3 + $0x290] sm:$0xff]
      %v116 = vld [vmem:[#allocation3 + $0x298] sm:$0xff]
      %v117 = vld [vmem:[#allocation3 + $0x2a0] sm:$0xff]
      %v118 = vld [vmem:[#allocation3 + $0x2a8] sm:$0xff]
      %v119 = vld [vmem:[#allocation3 + $0x2b0] sm:$0xff]
      %v120 = vld [vmem:[#allocation3 + $0x2b8] sm:$0xff]
      %v121 = vld [vmem:[#allocation3 + $0x2c0] sm:$0xff]
      %v122 = vld [vmem:[#allocation3 + $0x2c8] sm:$0xff]
      %v123 = vld [vmem:[#allocation3 + $0x2d0] sm:$0xff]
      %v124 = vld [vmem:[#allocation3 + $0x2d8] sm:$0xff]
      %v125 = vld [vmem:[#allocation3 + $0x2e0] sm:$0xff]
      %v126 = vld [vmem:[#allocation3 + $0x2e8] sm:$0xff]
      %v127 = vld [vmem:[#allocation3 + $0x2f0] sm:$0xff]
      %v128 = vld [vmem:[#allocation3 + $0x2f8] sm:$0xff]
      %v129 = vld [vmem:[#allocation3 + $0x300] sm:$0xff]
      %v130 = vld [vmem:[#allocation3 + $0x308] sm:$0xff]
      %v131 = vld [vmem:[#allocation3 + $0x310] sm:$0xff]
      %v132 = vld [vmem:[#allocation3 + $0x318] sm:$0xff]
      %v133 = vld [vmem:[#allocation3 + $0x320] sm:$0xff]
      %v134 = vld [vmem:[#allocation3 + $0x328] sm:$0xff]
      %v135 = vld [vmem:[#allocation3 + $0x330] sm:$0xff]
      %v136 = vld [vmem:[#allocation3 + $0x338] sm:$0xff]
      %v137 = vld [vmem:[#allocation3 + $0x340] sm:$0xff]
      %v138 = vld [vmem:[#allocation3 + $0x348] sm:$0xff]
      %v139 = vld [vmem:[#allocation3 + $0x350] sm:$0xff]
      %v140 = vld [vmem:[#allocation3 + $0x358] sm:$0xff]
      %v141 = vld [vmem:[#allocation3 + $0x360] sm:$0xff]
      %v142 = vld [vmem:[#allocation3 + $0x368] sm:$0xff]
      %v143 = vld [vmem:[#allocation3 + $0x370] sm:$0xff]
      %v144 = vld [vmem:[#allocation3 + $0x378] sm:$0xff]
      %v145 = vld [vmem:[#allocation3 + $0x380] sm:$0xff]
      %v146 = vld [vmem:[#allocation3 + $0x388] sm:$0xff]
      %v147 = vld [vmem:[#allocation3 + $0x390] sm:$0xff]
      %v148 = vld [vmem:[#allocation3 + $0x398] sm:$0xff]
      %v149 = vld [vmem:[#allocation3 + $0x3a0] sm:$0xff]
      %v150 = vld [vmem:[#allocation3 + $0x3a8] sm:$0xff]
      %v151 = vld [vmem:[#allocation3 + $0x3b0] sm:$0xff]
      %v152 = vld [vmem:[#allocation3 + $0x3b8] sm:$0xff]
      %v153 = vld [vmem:[#allocation3 + $0x3c0] sm:$0xff]
      %v154 = vld [vmem:[#allocation3 + $0x3c8] sm:$0xff]
      %v155 = vld [vmem:[#allocation3 + $0x3d0] sm:$0xff]
      %v156 = vld [vmem:[#allocation3 + $0x3d8] sm:$0xff]
      %v157 = vld [vmem:[#allocation3 + $0x3e0] sm:$0xff]
      %v158 = vld [vmem:[#allocation3 + $0x3e8] sm:$0xff]
      %v159 = vld [vmem:[#allocation3 + $0x3f0] sm:$0xff]
      %v160 = vld [vmem:[#allocation3 + $0x3f8] sm:$0xff]
      %v161 = vmul.f32 %v33, %v33
      %v162 = vmul.f32 %v34, %v34
      %v163 = vmul.f32 %v35, %v35
      %v164 = vmul.f32 %v36, %v36
      %v165 = vmul.f32 %v37, %v37
      %v166 = vmul.f32 %v38, %v38
      %v167 = vmul.f32 %v39, %v39
      %v168 = vmul.f32 %v40, %v40
      %v169 = vmul.f32 %v41, %v41
      %v170 = vmul.f32 %v42, %v42
      %v171 = vmul.f32 %v43, %v43
      %v172 = vmul.f32 %v44, %v44
      %v173 = vmul.f32 %v45, %v45
      %v174 = vmul.f32 %v46, %v46
      %v175 = vmul.f32 %v47, %v47
      %v176 = vmul.f32 %v48, %v48
      %v177 = vmul.f32 %v49, %v49
      %v178 = vmul.f32 %v50, %v50
      %v179 = vmul.f32 %v51, %v51
      %v180 = vmul.f32 %v52, %v52
      %v181 = vmul.f32 %v53, %v53
      %v182 = vmul.f32 %v54, %v54
      %v183 = vmul.f32 %v55, %v55
      %v184 = vmul.f32 %v56, %v56
      %v185 = vmul.f32 %v57, %v57
      %v186 = vmul.f32 %v58, %v58
      %v187 = vmul.f32 %v59, %v59
      %v188 = vmul.f32 %v60, %v60
      %v189 = vmul.f32 %v61, %v61
      %v190 = vmul.f32 %v62, %v62
      %v191 = vmul.f32 %v63, %v63
      %v192 = vmul.f32 %v64, %v64
      %v193 = vmul.f32 %v65, %v65
      %v194 = vmul.f32 %v66, %v66
      %v195 = vmul.f32 %v67, %v67
      %v196 = vmul.f32 %v68, %v68
      %v197 = vmul.f32 %v69, %v69
      %v198 = vmul.f32 %v70, %v70
      %v199 = vmul.f32 %v71, %v71
      %v200 = vmul.f32 %v72, %v72
      %v201 = vmul.f32 %v73, %v73
      %v202 = vmul.f32 %v74, %v74
      %v203 = vmul.f32 %v75, %v75
      %v204 = vmul.f32 %v76, %v76
      %v205 = vmul.f32 %v77, %v77
      %v206 = vmul.f32 %v78, %v78
      %v207 = vmul.f32 %v79, %v79
      %v208 = vmul.f32 %v80, %v80
      %v209 = vmul.f32 %v81, %v81
      %v210 = vmul.f32 %v82, %v82
      %v211 = vmul.f32 %v83, %v83
      %v212 = vmul.f32 %v84, %v84
      %v213 = vmul.f32 %v85, %v85
      %v214 = vmul.f32 %v86, %v86
      %v215 = vmul.f32 %v87, %v87
      %v216 = vmul.f32 %v88, %v88
      %v217 = vmul.f32 %v89, %v89
      %v218 = vmul.f32 %v90, %v90
      %v219 = vmul.f32 %v91, %v91
      %v220 = vmul.f32 %v92, %v92
      %v221 = vmul.f32 %v93, %v93
      %v222 = vmul.f32 %v94, %v94
      %v223 = vmul.f32 %v95, %v95
      %v224 = vmul.f32 %v96, %v96
      %v225 = vmul.f32 %v97, %v97
      %v226 = vmul.f32 %v98, %v98
      %v227 = vmul.f32 %v99, %v99
      %v228 = vmul.f32 %v100, %v100
      %v229 = vmul.f32 %v101, %v101
      %v230 = vmul.f32 %v102, %v102
      %v231 = vmul.f32 %v103, %v103
      %v232 = vmul.f32 %v104, %v104
      %v233 = vmul.f32 %v105, %v105
      %v234 = vmul.f32 %v106, %v106
      %v235 = vmul.f32 %v107, %v107
      %v236 = vmul.f32 %v108, %v108
      %v237 = vmul.f32 %v109, %v109
      %v238 = vmul.f32 %v110, %v110
      %v239 = vmul.f32 %v111, %v111
      %v240 = vmul.f32 %v112, %v112
      %v241 = vmul.f32 %v113, %v113
      %v242 = vmul.f32 %v114, %v114
      %v243 = vmul.f32 %v115, %v115
      %v244 = vmul.f32 %v116, %v116
      %v245 = vmul.f32 %v117, %v117
      %v246 = vmul.f32 %v118, %v118
      %v247 = vmul.f32 %v119, %v119
      %v248 = vmul.f32 %v120, %v120
      %v249 = vmul.f32 %v121, %v121
      %v250 = vmul.f32 %v122, %v122
      %v251 = vmul.f32 %v123, %v123
      %v252 = vmul.f32 %v124, %v124
      %v253 = vmul.f32 %v125, %v125
      %v254 = vmul.f32 %v126, %v126
      %v255 = vmul.f32 %v127, %v127
      %v256 = vmul.f32 %v128, %v128
      %v257 = vmul.f32 %v129, %v129
      %v258 = vmul.f32 %v130, %v130
      %v259 = vmul.f32 %v131, %v131
      %v260 = vmul.f32 %v132, %v132
      %v261 = vmul.f32 %v133, %v133
      %v262 = vmul.f32 %v134, %v134
      %v263 = vmul.f32 %v135, %v135
      %v264 = vmul.f32 %v136, %v136
      %v265 = vmul.f32 %v137, %v137
      %v266 = vmul.f32 %v138, %v138
      %v267 = vmul.f32 %v139, %v139
      %v268 = vmul.f32 %v140, %v140
      %v269 = vmul.f32 %v141, %v141
      %v270 = vmul.f32 %v142, %v142
      %v271 = vmul.f32 %v143, %v143
      %v272 = vmul.f32 %v144, %v144
      %v273 = vmul.f32 %v145, %v145
      %v274 = vmul.f32 %v146, %v146
      %v275 = vmul.f32 %v147, %v147
      %v276 = vmul.f32 %v148, %v148
      %v277 = vmul.f32 %v149, %v149
      %v278 = vmul.f32 %v150, %v150
      %v279 = vmul.f32 %v151, %v151
      %v280 = vmul.f32 %v152, %v152
      %v281 = vmul.f32 %v153, %v153
      %v282 = vmul.f32 %v154, %v154
      %v283 = vmul.f32 %v155, %v155
      %v284 = vmul.f32 %v156, %v156
      %v285 = vmul.f32 %v157, %v157
      %v286 = vmul.f32 %v158, %v158
      %v287 = vmul.f32 %v159, %v159
      %v288 = vmul.f32 %v160, %v160
      %289 = vmatprep.subr.mxu0 0.0
      %290 = vmatpush1.xpose.msra.mxu0 %v161
      %291 = vmatprep.subr.mxu0 0.0
      %292 = vmatpush1.xpose.msra.mxu0 %v162
      %293 = vmatprep.subr.mxu0 0.0
      %294 = vmatpush1.xpose.msra.mxu0 %v163
      %295 = vmatprep.subr.mxu0 0.0
      %296 = vmatpush1.xpose.msra.mxu0 %v164
      %297 = vmatprep.subr.mxu0 0.0
      %298 = vmatpush1.xpose.msra.mxu0 %v165
      %299 = vmatprep.subr.mxu0 0.0
      %300 = vmatpush1.xpose.msra.mxu0 %v166
      %301 = vmatprep.subr.mxu0 0.0
      %302 = vmatpush1.xpose.msra.mxu0 %v167
      %303 = vmatprep.subr.mxu0 0.0
      %304 = vmatpush1.xpose.msra.mxu0 %v168
      %305 = vmatprep.subr.mxu0 0.0
      %306 = vmatpush1.xpose.msra.mxu0 %v169
      %307 = vmatprep.subr.mxu0 0.0
      %308 = vmatpush1.xpose.msra.mxu0 %v170
      %309 = vmatprep.subr.mxu0 0.0
      %310 = vmatpush1.xpose.msra.mxu0 %v171
      %311 = vmatprep.subr.mxu0 0.0
      %312 = vmatpush1.xpose.msra.mxu0 %v172
      %313 = vmatprep.subr.mxu0 0.0
      %314 = vmatpush1.xpose.msra.mxu0 %v173
      %315 = vmatprep.subr.mxu0 0.0
      %316 = vmatpush1.xpose.msra.mxu0 %v174
      %317 = vmatprep.subr.mxu0 0.0
      %318 = vmatpush1.xpose.msra.mxu0 %v175
      %319 = vmatprep.subr.mxu0 0.0
      %320 = vmatpush1.xpose.msra.mxu0 %v176
      %321 = vmatprep.subr.mxu0 0.0
      %322 = vmatpush1.xpose.msra.mxu0 %v177
      %323 = vmatprep.subr.mxu0 0.0
      %324 = vmatpush1.xpose.msra.mxu0 %v178
      %325 = vmatprep.subr.mxu0 0.0
      %326 = vmatpush1.xpose.msra.mxu0 %v179
      %327 = vmatprep.subr.mxu0 0.0
      %328 = vmatpush1.xpose.msra.mxu0 %v180
      %329 = vmatprep.subr.mxu0 0.0
      %330 = vmatpush1.xpose.msra.mxu0 %v181
      %331 = vmatprep.subr.mxu0 0.0
      %332 = vmatpush1.xpose.msra.mxu0 %v182
      %333 = vmatprep.subr.mxu0 0.0
      %334 = vmatpush1.xpose.msra.mxu0 %v183
      %335 = vmatprep.subr.mxu0 0.0
      %336 = vmatpush1.xpose.msra.mxu0 %v184
      %337 = vmatprep.subr.mxu0 0.0
      %338 = vmatpush1.xpose.msra.mxu0 %v185
      %339 = vmatprep.subr.mxu0 0.0
      %340 = vmatpush1.xpose.msra.mxu0 %v186
      %341 = vmatprep.subr.mxu0 0.0
      %342 = vmatpush1.xpose.msra.mxu0 %v187
      %343 = vmatprep.subr.mxu0 0.0
      %344 = vmatpush1.xpose.msra.mxu0 %v188
      %345 = vmatprep.subr.mxu0 0.0
      %346 = vmatpush1.xpose.msra.mxu0 %v189
      %347 = vmatprep.subr.mxu0 0.0
      %348 = vmatpush1.xpose.msra.mxu0 %v190
      %349 = vmatprep.subr.mxu0 0.0
      %350 = vmatpush1.xpose.msra.mxu0 %v191
      %351 = vmatprep.subr.mxu0 0.0
      %352 = vmatpush1.xpose.msra.mxu0 %v192
      %353 = vmatprep.mubr.f32.mxu0 0.0
      %354 = vmatmul.mubr.f32.gmra.mrb[0].mxu0 1.0
      %v355 = vpop.f32.mrb[0].mxu0
      %v356 = vadd.f32 0.0, %v355
      %v357 = vpop.f32.mrb[0].mxu0
      %v358 = vadd.f32 0.0, %v357
      %359 = vdwg.mxu0
      %360 = vmatprep.subr.mxu0 0.0
      %361 = vmatpush1.xpose.msra.mxu0 %v193
      %362 = vmatprep.subr.mxu0 0.0
      %363 = vmatpush1.xpose.msra.mxu0 %v194
      %364 = vmatprep.subr.mxu0 0.0
      %365 = vmatpush1.xpose.msra.mxu0 %v195
      %366 = vmatprep.subr.mxu0 0.0
      %367 = vmatpush1.xpose.msra.mxu0 %v196
      %368 = vmatprep.subr.mxu0 0.0
      %369 = vmatpush1.xpose.msra.mxu0 %v197
      %370 = vmatprep.subr.mxu0 0.0
      %371 = vmatpush1.xpose.msra.mxu0 %v198
      %372 = vmatprep.subr.mxu0 0.0
      %373 = vmatpush1.xpose.msra.mxu0 %v199
      %374 = vmatprep.subr.mxu0 0.0
      %375 = vmatpush1.xpose.msra.mxu0 %v200
      %376 = vmatprep.subr.mxu0 0.0
      %377 = vmatpush1.xpose.msra.mxu0 %v201
      %378 = vmatprep.subr.mxu0 0.0
      %379 = vmatpush1.xpose.msra.mxu0 %v202
      %380 = vmatprep.subr.mxu0 0.0
      %381 = vmatpush1.xpose.msra.mxu0 %v203
      %382 = vmatprep.subr.mxu0 0.0
      %383 = vmatpush1.xpose.msra.mxu0 %v204
      %384 = vmatprep.subr.mxu0 0.0
      %385 = vmatpush1.xpose.msra.mxu0 %v205
      %386 = vmatprep.subr.mxu0 0.0
      %387 = vmatpush1.xpose.msra.mxu0 %v206
      %388 = vmatprep.subr.mxu0 0.0
      %389 = vmatpush1.xpose.msra.mxu0 %v207
      %390 = vmatprep.subr.mxu0 0.0
      %391 = vmatpush1.xpose.msra.mxu0 %v208
      %392 = vmatprep.subr.mxu0 0.0
      %393 = vmatpush1.xpose.msra.mxu0 %v209
      %394 = vmatprep.subr.mxu0 0.0
      %395 = vmatpush1.xpose.msra.mxu0 %v210
      %396 = vmatprep.subr.mxu0 0.0
      %397 = vmatpush1.xpose.msra.mxu0 %v211
      %398 = vmatprep.subr.mxu0 0.0
      %399 = vmatpush1.xpose.msra.mxu0 %v212
      %400 = vmatprep.subr.mxu0 0.0
      %401 = vmatpush1.xpose.msra.mxu0 %v213
      %402 = vmatprep.subr.mxu0 0.0
      %403 = vmatpush1.xpose.msra.mxu0 %v214
      %404 = vmatprep.subr.mxu0 0.0
      %405 = vmatpush1.xpose.msra.mxu0 %v215
      %406 = vmatprep.subr.mxu0 0.0
      %407 = vmatpush1.xpose.msra.mxu0 %v216
      %408 = vmatprep.subr.mxu0 0.0
      %409 = vmatpush1.xpose.msra.mxu0 %v217
      %410 = vmatprep.subr.mxu0 0.0
      %411 = vmatpush1.xpose.msra.mxu0 %v218
      %412 = vmatprep.subr.mxu0 0.0
      %413 = vmatpush1.xpose.msra.mxu0 %v219
      %414 = vmatprep.subr.mxu0 0.0
      %415 = vmatpush1.xpose.msra.mxu0 %v220
      %416 = vmatprep.subr.mxu0 0.0
      %417 = vmatpush1.xpose.msra.mxu0 %v221
      %418 = vmatprep.subr.mxu0 0.0
      %419 = vmatpush1.xpose.msra.mxu0 %v222
      %420 = vmatprep.subr.mxu0 0.0
      %421 = vmatpush1.xpose.msra.mxu0 %v223
      %422 = vmatprep.subr.mxu0 0.0
      %423 = vmatpush1.xpose.msra.mxu0 %v224
      %424 = vmatprep.mubr.f32.mxu0 0.0
      %425 = vmatmul.mubr.f32.gmra.mrb[0].mxu0 1.0
      %v426 = vpop.f32.mrb[0].mxu0
      %v427 = vadd.f32 0.0, %v426
      %v428 = vpop.f32.mrb[0].mxu0
      %v429 = vadd.f32 0.0, %v428
      %430 = vdwg.mxu0
      %431 = vmatprep.subr.mxu0 0.0
      %432 = vmatpush1.xpose.msra.mxu0 %v225
      %433 = vmatprep.subr.mxu0 0.0
      %434 = vmatpush1.xpose.msra.mxu0 %v226
      %435 = vmatprep.subr.mxu0 0.0
      %436 = vmatpush1.xpose.msra.mxu0 %v227
      %437 = vmatprep.subr.mxu0 0.0
      %438 = vmatpush1.xpose.msra.mxu0 %v228
      %439 = vmatprep.subr.mxu0 0.0
      %440 = vmatpush1.xpose.msra.mxu0 %v229
      %441 = vmatprep.subr.mxu0 0.0
      %442 = vmatpush1.xpose.msra.mxu0 %v230
      %443 = vmatprep.subr.mxu0 0.0
      %444 = vmatpush1.xpose.msra.mxu0 %v231
      %445 = vmatprep.subr.mxu0 0.0
      %446 = vmatpush1.xpose.msra.mxu0 %v232
      %447 = vmatprep.subr.mxu0 0.0
      %448 = vmatpush1.xpose.msra.mxu0 %v233
      %449 = vmatprep.subr.mxu0 0.0
      %450 = vmatpush1.xpose.msra.mxu0 %v234
      %451 = vmatprep.subr.mxu0 0.0
      %452 = vmatpush1.xpose.msra.mxu0 %v235
      %453 = vmatprep.subr.mxu0 0.0
      %454 = vmatpush1.xpose.msra.mxu0 %v236
      %455 = vmatprep.subr.mxu0 0.0
      %456 = vmatpush1.xpose.msra.mxu0 %v237
      %457 = vmatprep.subr.mxu0 0.0
      %458 = vmatpush1.xpose.msra.mxu0 %v238
      %459 = vmatprep.subr.mxu0 0.0
      %460 = vmatpush1.xpose.msra.mxu0 %v239
      %461 = vmatprep.subr.mxu0 0.0
      %462 = vmatpush1.xpose.msra.mxu0 %v240
      %463 = vmatprep.subr.mxu0 0.0
      %464 = vmatpush1.xpose.msra.mxu0 %v241
      %465 = vmatprep.subr.mxu0 0.0
      %466 = vmatpush1.xpose.msra.mxu0 %v242
      %467 = vmatprep.subr.mxu0 0.0
      %468 = vmatpush1.xpose.msra.mxu0 %v243
      %469 = vmatprep.subr.mxu0 0.0
      %470 = vmatpush1.xpose.msra.mxu0 %v244
      %471 = vmatprep.subr.mxu0 0.0
      %472 = vmatpush1.xpose.msra.mxu0 %v245
      %473 = vmatprep.subr.mxu0 0.0
      %474 = vmatpush1.xpose.msra.mxu0 %v246
      %475 = vmatprep.subr.mxu0 0.0
      %476 = vmatpush1.xpose.msra.mxu0 %v247
      %477 = vmatprep.subr.mxu0 0.0
      %478 = vmatpush1.xpose.msra.mxu0 %v248
      %479 = vmatprep.subr.mxu0 0.0
      %480 = vmatpush1.xpose.msra.mxu0 %v249
      %481 = vmatprep.subr.mxu0 0.0
      %482 = vmatpush1.xpose.msra.mxu0 %v250
      %483 = vmatprep.subr.mxu0 0.0
      %484 = vmatpush1.xpose.msra.mxu0 %v251
      %485 = vmatprep.subr.mxu0 0.0
      %486 = vmatpush1.xpose.msra.mxu0 %v252
      %487 = vmatprep.subr.mxu0 0.0
      %488 = vmatpush1.xpose.msra.mxu0 %v253
      %489 = vmatprep.subr.mxu0 0.0
      %490 = vmatpush1.xpose.msra.mxu0 %v254
      %491 = vmatprep.subr.mxu0 0.0
      %492 = vmatpush1.xpose.msra.mxu0 %v255
      %493 = vmatprep.subr.mxu0 0.0
      %494 = vmatpush1.xpose.msra.mxu0 %v256
      %495 = vmatprep.mubr.f32.mxu0 0.0
      %496 = vmatmul.mubr.f32.gmra.mrb[0].mxu0 1.0
      %v497 = vpop.f32.mrb[0].mxu0
      %v498 = vadd.f32 0.0, %v497
      %v499 = vpop.f32.mrb[0].mxu0
      %v500 = vadd.f32 0.0, %v499
      %501 = vdwg.mxu0
      %502 = vmatprep.subr.mxu0 0.0
      %503 = vmatpush1.xpose.msra.mxu0 %v257
      %504 = vmatprep.subr.mxu0 0.0
      %505 = vmatpush1.xpose.msra.mxu0 %v258
      %506 = vmatprep.subr.mxu0 0.0
      %507 = vmatpush1.xpose.msra.mxu0 %v259
      %508 = vmatprep.subr.mxu0 0.0
      %509 = vmatpush1.xpose.msra.mxu0 %v260
      %510 = vmatprep.subr.mxu0 0.0
      %511 = vmatpush1.xpose.msra.mxu0 %v261
      %512 = vmatprep.subr.mxu0 0.0
      %513 = vmatpush1.xpose.msra.mxu0 %v262
      %514 = vmatprep.subr.mxu0 0.0
      %515 = vmatpush1.xpose.msra.mxu0 %v263
      %516 = vmatprep.subr.mxu0 0.0
      %517 = vmatpush1.xpose.msra.mxu0 %v264
      %518 = vmatprep.subr.mxu0 0.0
      %519 = vmatpush1.xpose.msra.mxu0 %v265
      %520 = vmatprep.subr.mxu0 0.0
      %521 = vmatpush1.xpose.msra.mxu0 %v266
      %522 = vmatprep.subr.mxu0 0.0
      %523 = vmatpush1.xpose.msra.mxu0 %v267
      %524 = vmatprep.subr.mxu0 0.0
      %525 = vmatpush1.xpose.msra.mxu0 %v268
      %526 = vmatprep.subr.mxu0 0.0
      %527 = vmatpush1.xpose.msra.mxu0 %v269
      %528 = vmatprep.subr.mxu0 0.0
      %529 = vmatpush1.xpose.msra.mxu0 %v270
      %530 = vmatprep.subr.mxu0 0.0
      %531 = vmatpush1.xpose.msra.mxu0 %v271
      %532 = vmatprep.subr.mxu0 0.0
      %533 = vmatpush1.xpose.msra.mxu0 %v272
      %534 = vmatprep.subr.mxu0 0.0
      %535 = vmatpush1.xpose.msra.mxu0 %v273
      %536 = vmatprep.subr.mxu0 0.0
      %537 = vmatpush1.xpose.msra.mxu0 %v274
      %538 = vmatprep.subr.mxu0 0.0
      %539 = vmatpush1.xpose.msra.mxu0 %v275
      %540 = vmatprep.subr.mxu0 0.0
      %541 = vmatpush1.xpose.msra.mxu0 %v276
      %542 = vmatprep.subr.mxu0 0.0
      %543 = vmatpush1.xpose.msra.mxu0 %v277
      %544 = vmatprep.subr.mxu0 0.0
      %545 = vmatpush1.xpose.msra.mxu0 %v278
      %546 = vmatprep.subr.mxu0 0.0
      %547 = vmatpush1.xpose.msra.mxu0 %v279
      %548 = vmatprep.subr.mxu0 0.0
      %549 = vmatpush1.xpose.msra.mxu0 %v280
      %550 = vmatprep.subr.mxu0 0.0
      %551 = vmatpush1.xpose.msra.mxu0 %v281
      %552 = vmatprep.subr.mxu0 0.0
      %553 = vmatpush1.xpose.msra.mxu0 %v282
      %554 = vmatprep.subr.mxu0 0.0
      %555 = vmatpush1.xpose.msra.mxu0 %v283
      %556 = vmatprep.subr.mxu0 0.0
      %557 = vmatpush1.xpose.msra.mxu0 %v284
      %558 = vmatprep.subr.mxu0 0.0
      %559 = vmatpush1.xpose.msra.mxu0 %v285
      %560 = vmatprep.subr.mxu0 0.0
      %561 = vmatpush1.xpose.msra.mxu0 %v286
      %562 = vmatprep.subr.mxu0 0.0
      %563 = vmatpush1.xpose.msra.mxu0 %v287
      %564 = vmatprep.subr.mxu0 0.0
      %565 = vmatpush1.xpose.msra.mxu0 %v288
      %566 = vmatprep.mubr.f32.mxu0 0.0
      %567 = vmatmul.mubr.f32.gmra.mrb[0].mxu0 1.0
      %v568 = vpop.f32.mrb[0].mxu0
      %v569 = vadd.f32 0.0, %v568
      %v570 = vpop.f32.mrb[0].mxu0
      %v571 = vadd.f32 0.0, %v570
      %572 = vdwg.mxu0
      %v573 = vmax.f32 %v356, 1e-24
      %v574 = vmax.f32 %v358, 1e-24
      %v575 = vmax.f32 %v427, 1e-24
      %v576 = vmax.f32 %v429, 1e-24
      %v577 = vmax.f32 %v498, 1e-24
      %v578 = vmax.f32 %v500, 1e-24
      %v579 = vmax.f32 %v569, 1e-24
      %v580 = vmax.f32 %v571, 1e-24
      %v581 = vrsqrt.pop %v573
      %v582 = vrsqrt.pop %v574
      %v583 = vrsqrt.pop %v575
      %v584 = vrsqrt.pop %v576
      %v585 = vrsqrt.pop %v577
      %v586 = vrsqrt.pop %v578
      %v587 = vrsqrt.pop %v579
      %v588 = vrsqrt.pop %v580
      %v597 = vcombine.low %v581, %v582
      %v598 = vcombine.low %v583, %v584
      %v599 = vcombine.low %v585, %v586
      %v600 = vcombine.low %v587, %v588
      %v602 = vunpack.c.l.s4 1966171168
      %v603 = vunpack.c.0.s8 %v602
      %v604 = vlaneseq
      %v605 = vshrl.u32 %v604, 7
      %v606 = vsub.s32 %v603, %v605
      %v607 = vrot.slane %v597, %v606
      %v609 = vunpack.c.l.s4 1966171168
      %v610 = vunpack.c.0.s8 %v609
      %v611 = vlaneseq
      %v612 = vshrl.u32 %v611, 7
      %v613 = vsub.s32 %v610, %v612
      %v614 = vrot.slane %v598, %v613
      %v616 = vunpack.c.l.s4 1966171168
      %v617 = vunpack.c.0.s8 %v616
      %v618 = vlaneseq
      %v619 = vshrl.u32 %v618, 7
      %v620 = vsub.s32 %v617, %v619
      %v621 = vrot.slane %v599, %v620
      %v623 = vunpack.c.l.s4 1966171168
      %v624 = vunpack.c.0.s8 %v623
      %v625 = vlaneseq
      %v626 = vshrl.u32 %v625, 7
      %v627 = vsub.s32 %v624, %v626
      %v628 = vrot.slane %v600, %v627
      %v629 = vcombine.low %v607, %v614
      %v630 = vcombine.low %v621, %v628
      %v632 = vunpack.c.l.s4 1966171168
      %v633 = vunpack.c.0.s8 %v632
      %v634 = vlaneseq
      %v635 = vshrl.u32 %v634, 7
      %v636 = vsub.s32 %v633, %v635
      %v637 = vrot.slane %v629, %v636
      %v639 = vunpack.c.l.s4 1966171168
      %v640 = vunpack.c.0.s8 %v639
      %v641 = vlaneseq
      %v642 = vshrl.u32 %v641, 7
      %v643 = vsub.s32 %v640, %v642
      %v644 = vrot.slane %v630, %v643
      %v645 = vcombine.low %v637, %v644
      %647 = vst [vmem:[#allocation2] sm:$0xff] %v645
    $region21: #{tpu_custom_call.1} parent=1 // pred_fallthru
      _
    %v648 = vld [vmem:[%s1] sm:$0xff]
    %v649 = vld [vmem:[#allocation3] sm:$0xff]
    %v650 = vld [vmem:[#allocation3 + $0x8] sm:$0xff]
    %v651 = vld [vmem:[#allocation3 + $0x10] sm:$0xff]
    %v652 = vld [vmem:[#allocation3 + $0x18] sm:$0xff]
    %v653 = vld [vmem:[#allocation3 + $0x20] sm:$0xff]
    %v654 = vld [vmem:[#allocation3 + $0x28] sm:$0xff]
    %v655 = vld [vmem:[#allocation3 + $0x30] sm:$0xff]
    %v656 = vld [vmem:[#allocation3 + $0x38] sm:$0xff]
    %v657 = vld [vmem:[#allocation3 + $0x40] sm:$0xff]
    %v658 = vld [vmem:[#allocation3 + $0x48] sm:$0xff]
    %v659 = vld [vmem:[#allocation3 + $0x50] sm:$0xff]
    %v660 = vld [vmem:[#allocation3 + $0x58] sm:$0xff]
    %v661 = vld [vmem:[#allocation3 + $0x60] sm:$0xff]
    %v662 = vld [vmem:[#allocation3 + $0x68] sm:$0xff]
    %v663 = vld [vmem:[#allocation3 + $0x70] sm:$0xff]
    %v664 = vld [vmem:[#allocation3 + $0x78] sm:$0xff]
    %v665 = vld [vmem:[#allocation3 + $0x80] sm:$0xff]
    %v666 = vld [vmem:[#allocation3 + $0x88] sm:$0xff]
    %v667 = vld [vmem:[#allocation3 + $0x90] sm:$0xff]
    %v668 = vld [vmem:[#allocation3 + $0x98] sm:$0xff]
    %v669 = vld [vmem:[#allocation3 + $0xa0] sm:$0xff]
    %v670 = vld [vmem:[#allocation3 + $0xa8] sm:$0xff]
    %v671 = vld [vmem:[#allocation3 + $0xb0] sm:$0xff]
    %v672 = vld [vmem:[#allocation3 + $0xb8] sm:$0xff]
    %v673 = vld [vmem:[#allocation3 + $0xc0] sm:$0xff]
    %v674 = vld [vmem:[#allocation3 + $0xc8] sm:$0xff]
    %v675 = vld [vmem:[#allocation3 + $0xd0] sm:$0xff]
    %v676 = vld [vmem:[#allocation3 + $0xd8] sm:$0xff]
    %v677 = vld [vmem:[#allocation3 + $0xe0] sm:$0xff]
    %v678 = vld [vmem:[#allocation3 + $0xe8] sm:$0xff]
    %v679 = vld [vmem:[#allocation3 + $0xf0] sm:$0xff]
    %v680 = vld [vmem:[#allocation3 + $0xf8] sm:$0xff]
    %v681 = vld [vmem:[#allocation3 + $0x100] sm:$0xff]
    %v682 = vld [vmem:[#allocation3 + $0x108] sm:$0xff]
    %v683 = vld [vmem:[#allocation3 + $0x110] sm:$0xff]
    %v684 = vld [vmem:[#allocation3 + $0x118] sm:$0xff]
    %v685 = vld [vmem:[#allocation3 + $0x120] sm:$0xff]
    %v686 = vld [vmem:[#allocation3 + $0x128] sm:$0xff]
    %v687 = vld [vmem:[#allocation3 + $0x130] sm:$0xff]
    %v688 = vld [vmem:[#allocation3 + $0x138] sm:$0xff]
    %v689 = vld [vmem:[#allocation3 + $0x140] sm:$0xff]
    %v690 = vld [vmem:[#allocation3 + $0x148] sm:$0xff]
    %v691 = vld [vmem:[#allocation3 + $0x150] sm:$0xff]
    %v692 = vld [vmem:[#allocation3 + $0x158] sm:$0xff]
    %v693 = vld [vmem:[#allocation3 + $0x160] sm:$0xff]
    %v694 = vld [vmem:[#allocation3 + $0x168] sm:$0xff]
    %v695 = vld [vmem:[#allocation3 + $0x170] sm:$0xff]
    %v696 = vld [vmem:[#allocation3 + $0x178] sm:$0xff]
    %v697 = vld [vmem:[#allocation3 + $0x180] sm:$0xff]
    %v698 = vld [vmem:[#allocation3 + $0x188] sm:$0xff]
    %v699 = vld [vmem:[#allocation3 + $0x190] sm:$0xff]
    %v700 = vld [vmem:[#allocation3 + $0x198] sm:$0xff]
    %v701 = vld [vmem:[#allocation3 + $0x1a0] sm:$0xff]
    %v702 = vld [vmem:[#allocation3 + $0x1a8] sm:$0xff]
    %v703 = vld [vmem:[#allocation3 + $0x1b0] sm:$0xff]
    %v704 = vld [vmem:[#allocation3 + $0x1b8] sm:$0xff]
    %v705 = vld [vmem:[#allocation3 + $0x1c0] sm:$0xff]
    %v706 = vld [vmem:[#allocation3 + $0x1c8] sm:$0xff]
    %v707 = vld [vmem:[#allocation3 + $0x1d0] sm:$0xff]
    %v708 = vld [vmem:[#allocation3 + $0x1d8] sm:$0xff]
    %v709 = vld [vmem:[#allocation3 + $0x1e0] sm:$0xff]
    %v710 = vld [vmem:[#allocation3 + $0x1e8] sm:$0xff]
    %v711 = vld [vmem:[#allocation3 + $0x1f0] sm:$0xff]
    %v712 = vld [vmem:[#allocation3 + $0x1f8] sm:$0xff]
    %v713 = vld [vmem:[#allocation3 + $0x200] sm:$0xff]
    %v714 = vld [vmem:[#allocation3 + $0x208] sm:$0xff]
    %v715 = vld [vmem:[#allocation3 + $0x210] sm:$0xff]
    %v716 = vld [vmem:[#allocation3 + $0x218] sm:$0xff]
    %v717 = vld [vmem:[#allocation3 + $0x220] sm:$0xff]
    %v718 = vld [vmem:[#allocation3 + $0x228] sm:$0xff]
    %v719 = vld [vmem:[#allocation3 + $0x230] sm:$0xff]
    %v720 = vld [vmem:[#allocation3 + $0x238] sm:$0xff]
    %v721 = vld [vmem:[#allocation3 + $0x240] sm:$0xff]
    %v722 = vld [vmem:[#allocation3 + $0x248] sm:$0xff]
    %v723 = vld [vmem:[#allocation3 + $0x250] sm:$0xff]
    %v724 = vld [vmem:[#allocation3 + $0x258] sm:$0xff]
    %v725 = vld [vmem:[#allocation3 + $0x260] sm:$0xff]
    %v726 = vld [vmem:[#allocation3 + $0x268] sm:$0xff]
    %v727 = vld [vmem:[#allocation3 + $0x270] sm:$0xff]
    %v728 = vld [vmem:[#allocation3 + $0x278] sm:$0xff]
    %v729 = vld [vmem:[#allocation3 + $0x280] sm:$0xff]
    %v730 = vld [vmem:[#allocation3 + $0x288] sm:$0xff]
    %v731 = vld [vmem:[#allocation3 + $0x290] sm:$0xff]
    %v732 = vld [vmem:[#allocation3 + $0x298] sm:$0xff]
    %v733 = vld [vmem:[#allocation3 + $0x2a0] sm:$0xff]
    %v734 = vld [vmem:[#allocation3 + $0x2a8] sm:$0xff]
    %v735 = vld [vmem:[#allocation3 + $0x2b0] sm:$0xff]
    %v736 = vld [vmem:[#allocation3 + $0x2b8] sm:$0xff]
    %v737 = vld [vmem:[#allocation3 + $0x2c0] sm:$0xff]
    %v738 = vld [vmem:[#allocation3 + $0x2c8] sm:$0xff]
    %v739 = vld [vmem:[#allocation3 + $0x2d0] sm:$0xff]
    %v740 = vld [vmem:[#allocation3 + $0x2d8] sm:$0xff]
    %v741 = vld [vmem:[#allocation3 + $0x2e0] sm:$0xff]
    %v742 = vld [vmem:[#allocation3 + $0x2e8] sm:$0xff]
    %v743 = vld [vmem:[#allocation3 + $0x2f0] sm:$0xff]
    %v744 = vld [vmem:[#allocation3 + $0x2f8] sm:$0xff]
    %v745 = vld [vmem:[#allocation3 + $0x300] sm:$0xff]
    %v746 = vld [vmem:[#allocation3 + $0x308] sm:$0xff]
    %v747 = vld [vmem:[#allocation3 + $0x310] sm:$0xff]
    %v748 = vld [vmem:[#allocation3 + $0x318] sm:$0xff]
    %v749 = vld [vmem:[#allocation3 + $0x320] sm:$0xff]
    %v750 = vld [vmem:[#allocation3 + $0x328] sm:$0xff]
    %v751 = vld [vmem:[#allocation3 + $0x330] sm:$0xff]
    %v752 = vld [vmem:[#allocation3 + $0x338] sm:$0xff]
    %v753 = vld [vmem:[#allocation3 + $0x340] sm:$0xff]
    %v754 = vld [vmem:[#allocation3 + $0x348] sm:$0xff]
    %v755 = vld [vmem:[#allocation3 + $0x350] sm:$0xff]
    %v756 = vld [vmem:[#allocation3 + $0x358] sm:$0xff]
    %v757 = vld [vmem:[#allocation3 + $0x360] sm:$0xff]
    %v758 = vld [vmem:[#allocation3 + $0x368] sm:$0xff]
    %v759 = vld [vmem:[#allocation3 + $0x370] sm:$0xff]
    %v760 = vld [vmem:[#allocation3 + $0x378] sm:$0xff]
    %v761 = vld [vmem:[#allocation3 + $0x380] sm:$0xff]
    %v762 = vld [vmem:[#allocation3 + $0x388] sm:$0xff]
    %v763 = vld [vmem:[#allocation3 + $0x390] sm:$0xff]
    %v764 = vld [vmem:[#allocation3 + $0x398] sm:$0xff]
    %v765 = vld [vmem:[#allocation3 + $0x3a0] sm:$0xff]
    %v766 = vld [vmem:[#allocation3 + $0x3a8] sm:$0xff]
    %v767 = vld [vmem:[#allocation3 + $0x3b0] sm:$0xff]
    %v768 = vld [vmem:[#allocation3 + $0x3b8] sm:$0xff]
    %v769 = vld [vmem:[#allocation3 + $0x3c0] sm:$0xff]
    %v770 = vld [vmem:[#allocation3 + $0x3c8] sm:$0xff]
    %v771 = vld [vmem:[#allocation3 + $0x3d0] sm:$0xff]
    %v772 = vld [vmem:[#allocation3 + $0x3d8] sm:$0xff]
    %v773 = vld [vmem:[#allocation3 + $0x3e0] sm:$0xff]
    %v774 = vld [vmem:[#allocation3 + $0x3e8] sm:$0xff]
    %v775 = vld [vmem:[#allocation3 + $0x3f0] sm:$0xff]
    %v776 = vld [vmem:[#allocation3 + $0x3f8] sm:$0xff]
    %777 = vmatprep.subr.mxu0 0.0
    %778 = vmatpush1.xpose.msra.mxu0 %v649
    %779 = vmatprep.subr.mxu0 0.0
    %780 = vmatpush1.xpose.msra.mxu0 %v650
    %781 = vmatprep.subr.mxu0 0.0
    %782 = vmatpush1.xpose.msra.mxu0 %v651
    %783 = vmatprep.subr.mxu0 0.0
    %784 = vmatpush1.xpose.msra.mxu0 %v652
    %785 = vmatprep.subr.mxu0 0.0
    %786 = vmatpush1.xpose.msra.mxu0 %v653
    %787 = vmatprep.subr.mxu0 0.0
    %788 = vmatpush1.xpose.msra.mxu0 %v654
    %789 = vmatprep.subr.mxu0 0.0
    %790 = vmatpush1.xpose.msra.mxu0 %v655
    %791 = vmatprep.subr.mxu0 0.0
    %792 = vmatpush1.xpose.msra.mxu0 %v656
    %793 = vmatprep.subr.mxu0 0.0
    %794 = vmatpush1.xpose.msra.mxu0 %v657
    %795 = vmatprep.subr.mxu0 0.0
    %796 = vmatpush1.xpose.msra.mxu0 %v658
    %797 = vmatprep.subr.mxu0 0.0
    %798 = vmatpush1.xpose.msra.mxu0 %v659
    %799 = vmatprep.subr.mxu0 0.0
    %800 = vmatpush1.xpose.msra.mxu0 %v660
    %801 = vmatprep.subr.mxu0 0.0
    %802 = vmatpush1.xpose.msra.mxu0 %v661
    %803 = vmatprep.subr.mxu0 0.0
    %804 = vmatpush1.xpose.msra.mxu0 %v662
    %805 = vmatprep.subr.mxu0 0.0
    %806 = vmatpush1.xpose.msra.mxu0 %v663
    %807 = vmatprep.subr.mxu0 0.0
    %808 = vmatpush1.xpose.msra.mxu0 %v664
    %809 = vmatprep.subr.mxu0 0.0
    %810 = vmatpush1.xpose.msra.mxu0 %v665
    %811 = vmatprep.subr.mxu0 0.0
    %812 = vmatpush1.xpose.msra.mxu0 %v666
    %813 = vmatprep.subr.mxu0 0.0
    %814 = vmatpush1.xpose.msra.mxu0 %v667
    %815 = vmatprep.subr.mxu0 0.0
    %816 = vmatpush1.xpose.msra.mxu0 %v668
    %817 = vmatprep.subr.mxu0 0.0
    %818 = vmatpush1.xpose.msra.mxu0 %v669
    %819 = vmatprep.subr.mxu0 0.0
    %820 = vmatpush1.xpose.msra.mxu0 %v670
    %821 = vmatprep.subr.mxu0 0.0
    %822 = vmatpush1.xpose.msra.mxu0 %v671
    %823 = vmatprep.subr.mxu0 0.0
    %824 = vmatpush1.xpose.msra.mxu0 %v672
    %825 = vmatprep.subr.mxu0 0.0
    %826 = vmatpush1.xpose.msra.mxu0 %v673
    %827 = vmatprep.subr.mxu0 0.0
    %828 = vmatpush1.xpose.msra.mxu0 %v674
    %829 = vmatprep.subr.mxu0 0.0
    %830 = vmatpush1.xpose.msra.mxu0 %v675
    %831 = vmatprep.subr.mxu0 0.0
    %832 = vmatpush1.xpose.msra.mxu0 %v676
    %833 = vmatprep.subr.mxu0 0.0
    %834 = vmatpush1.xpose.msra.mxu0 %v677
    %835 = vmatprep.subr.mxu0 0.0
    %836 = vmatpush1.xpose.msra.mxu0 %v678
    %837 = vmatprep.subr.mxu0 0.0
    %838 = vmatpush1.xpose.msra.mxu0 %v679
    %839 = vmatprep.subr.mxu0 0.0
    %840 = vmatpush1.xpose.msra.mxu0 %v680
    %841 = vmatprep.mubr.f32.mxu0 0.0
    %842 = vmatmul.mubr.f32.gmra.mrb[0].mxu0 %v648
    %v843 = vpop.f32.mrb[0].mxu0
    %v844 = vadd.f32 0.0, %v843
    %v845 = vpop.f32.mrb[0].mxu0
    %v846 = vadd.f32 0.0, %v845
    %847 = vdwg.mxu0
    %848 = vmatprep.subr.mxu0 0.0
    %849 = vmatpush1.xpose.msra.mxu0 %v681
    %850 = vmatprep.subr.mxu0 0.0
    %851 = vmatpush1.xpose.msra.mxu0 %v682
    %852 = vmatprep.subr.mxu0 0.0
    %853 = vmatpush1.xpose.msra.mxu0 %v683
    %854 = vmatprep.subr.mxu0 0.0
    %855 = vmatpush1.xpose.msra.mxu0 %v684
    %856 = vmatprep.subr.mxu0 0.0
    %857 = vmatpush1.xpose.msra.mxu0 %v685
    %858 = vmatprep.subr.mxu0 0.0
    %859 = vmatpush1.xpose.msra.mxu0 %v686
    %860 = vmatprep.subr.mxu0 0.0
    %861 = vmatpush1.xpose.msra.mxu0 %v687
    %862 = vmatprep.subr.mxu0 0.0
    %863 = vmatpush1.xpose.msra.mxu0 %v688
    %864 = vmatprep.subr.mxu0 0.0
    %865 = vmatpush1.xpose.msra.mxu0 %v689
    %866 = vmatprep.subr.mxu0 0.0
    %867 = vmatpush1.xpose.msra.mxu0 %v690
    %868 = vmatprep.subr.mxu0 0.0
    %869 = vmatpush1.xpose.msra.mxu0 %v691
    %870 = vmatprep.subr.mxu0 0.0
    %871 = vmatpush1.xpose.msra.mxu0 %v692
    %872 = vmatprep.subr.mxu0 0.0
    %873 = vmatpush1.xpose.msra.mxu0 %v693
    %874 = vmatprep.subr.mxu0 0.0
    %875 = vmatpush1.xpose.msra.mxu0 %v694
    %876 = vmatprep.subr.mxu0 0.0
    %877 = vmatpush1.xpose.msra.mxu0 %v695
    %878 = vmatprep.subr.mxu0 0.0
    %879 = vmatpush1.xpose.msra.mxu0 %v696
    %880 = vmatprep.subr.mxu0 0.0
    %881 = vmatpush1.xpose.msra.mxu0 %v697
    %882 = vmatprep.subr.mxu0 0.0
    %883 = vmatpush1.xpose.msra.mxu0 %v698
    %884 = vmatprep.subr.mxu0 0.0
    %885 = vmatpush1.xpose.msra.mxu0 %v699
    %886 = vmatprep.subr.mxu0 0.0
    %887 = vmatpush1.xpose.msra.mxu0 %v700
    %888 = vmatprep.subr.mxu0 0.0
    %889 = vmatpush1.xpose.msra.mxu0 %v701
    %890 = vmatprep.subr.mxu0 0.0
    %891 = vmatpush1.xpose.msra.mxu0 %v702
    %892 = vmatprep.subr.mxu0 0.0
    %893 = vmatpush1.xpose.msra.mxu0 %v703
    %894 = vmatprep.subr.mxu0 0.0
    %895 = vmatpush1.xpose.msra.mxu0 %v704
    %896 = vmatprep.subr.mxu0 0.0
    %897 = vmatpush1.xpose.msra.mxu0 %v705
    %898 = vmatprep.subr.mxu0 0.0
    %899 = vmatpush1.xpose.msra.mxu0 %v706
    %900 = vmatprep.subr.mxu0 0.0
    %901 = vmatpush1.xpose.msra.mxu0 %v707
    %902 = vmatprep.subr.mxu0 0.0
    %903 = vmatpush1.xpose.msra.mxu0 %v708
    %904 = vmatprep.subr.mxu0 0.0
    %905 = vmatpush1.xpose.msra.mxu0 %v709
    %906 = vmatprep.subr.mxu0 0.0
    %907 = vmatpush1.xpose.msra.mxu0 %v710
    %908 = vmatprep.subr.mxu0 0.0
    %909 = vmatpush1.xpose.msra.mxu0 %v711
    %910 = vmatprep.subr.mxu0 0.0
    %911 = vmatpush1.xpose.msra.mxu0 %v712
    %912 = vmatprep.mubr.f32.mxu0 0.0
    %913 = vmatmul.mubr.f32.gmra.mrb[0].mxu0 %v648
    %v914 = vpop.f32.mrb[0].mxu0
    %v915 = vadd.f32 0.0, %v914
    %v916 = vpop.f32.mrb[0].mxu0
    %v917 = vadd.f32 0.0, %v916
    %918 = vdwg.mxu0
    %919 = vmatprep.subr.mxu0 0.0
    %920 = vmatpush1.xpose.msra.mxu0 %v713
    %921 = vmatprep.subr.mxu0 0.0
    %922 = vmatpush1.xpose.msra.mxu0 %v714
    %923 = vmatprep.subr.mxu0 0.0
    %924 = vmatpush1.xpose.msra.mxu0 %v715
    %925 = vmatprep.subr.mxu0 0.0
    %926 = vmatpush1.xpose.msra.mxu0 %v716
    %927 = vmatprep.subr.mxu0 0.0
    %928 = vmatpush1.xpose.msra.mxu0 %v717
    %929 = vmatprep.subr.mxu0 0.0
    %930 = vmatpush1.xpose.msra.mxu0 %v718
    %931 = vmatprep.subr.mxu0 0.0
    %932 = vmatpush1.xpose.msra.mxu0 %v719
    %933 = vmatprep.subr.mxu0 0.0
    %934 = vmatpush1.xpose.msra.mxu0 %v720
    %935 = vmatprep.subr.mxu0 0.0
    %936 = vmatpush1.xpose.msra.mxu0 %v721
    %937 = vmatprep.subr.mxu0 0.0
    %938 = vmatpush1.xpose.msra.mxu0 %v722
    %939 = vmatprep.subr.mxu0 0.0
    %940 = vmatpush1.xpose.msra.mxu0 %v723
    %941 = vmatprep.subr.mxu0 0.0
    %942 = vmatpush1.xpose.msra.mxu0 %v724
    %943 = vmatprep.subr.mxu0 0.0
    %944 = vmatpush1.xpose.msra.mxu0 %v725
    %945 = vmatprep.subr.mxu0 0.0
    %946 = vmatpush1.xpose.msra.mxu0 %v726
    %947 = vmatprep.subr.mxu0 0.0
    %948 = vmatpush1.xpose.msra.mxu0 %v727
    %949 = vmatprep.subr.mxu0 0.0
    %950 = vmatpush1.xpose.msra.mxu0 %v728
    %951 = vmatprep.subr.mxu0 0.0
    %952 = vmatpush1.xpose.msra.mxu0 %v729
    %953 = vmatprep.subr.mxu0 0.0
    %954 = vmatpush1.xpose.msra.mxu0 %v730
    %955 = vmatprep.subr.mxu0 0.0
    %956 = vmatpush1.xpose.msra.mxu0 %v731
    %957 = vmatprep.subr.mxu0 0.0
    %958 = vmatpush1.xpose.msra.mxu0 %v732
    %959 = vmatprep.subr.mxu0 0.0
    %960 = vmatpush1.xpose.msra.mxu0 %v733
    %961 = vmatprep.subr.mxu0 0.0
    %962 = vmatpush1.xpose.msra.mxu0 %v734
    %963 = vmatprep.subr.mxu0 0.0
    %964 = vmatpush1.xpose.msra.mxu0 %v735
    %965 = vmatprep.subr.mxu0 0.0
    %966 = vmatpush1.xpose.msra.mxu0 %v736
    %967 = vmatprep.subr.mxu0 0.0
    %968 = vmatpush1.xpose.msra.mxu0 %v737
    %969 = vmatprep.subr.mxu0 0.0
    %970 = vmatpush1.xpose.msra.mxu0 %v738
    %971 = vmatprep.subr.mxu0 0.0
    %972 = vmatpush1.xpose.msra.mxu0 %v739
    %973 = vmatprep.subr.mxu0 0.0
    %974 = vmatpush1.xpose.msra.mxu0 %v740
    %975 = vmatprep.subr.mxu0 0.0
    %976 = vmatpush1.xpose.msra.mxu0 %v741
    %977 = vmatprep.subr.mxu0 0.0
    %978 = vmatpush1.xpose.msra.mxu0 %v742
    %979 = vmatprep.subr.mxu0 0.0
    %980 = vmatpush1.xpose.msra.mxu0 %v743
    %981 = vmatprep.subr.mxu0 0.0
    %982 = vmatpush1.xpose.msra.mxu0 %v744
    %983 = vmatprep.mubr.f32.mxu0 0.0
    %984 = vmatmul.mubr.f32.gmra.mrb[0].mxu0 %v648
    %v985 = vpop.f32.mrb[0].mxu0
    %v986 = vadd.f32 0.0, %v985
    %v987 = vpop.f32.mrb[0].mxu0
    %v988 = vadd.f32 0.0, %v987
    %989 = vdwg.mxu0
    %990 = vmatprep.subr.mxu0 0.0
    %991 = vmatpush1.xpose.msra.mxu0 %v745
    %992 = vmatprep.subr.mxu0 0.0
    %993 = vmatpush1.xpose.msra.mxu0 %v746
    %994 = vmatprep.subr.mxu0 0.0
    %995 = vmatpush1.xpose.msra.mxu0 %v747
    %996 = vmatprep.subr.mxu0 0.0
    %997 = vmatpush1.xpose.msra.mxu0 %v748
    %998 = vmatprep.subr.mxu0 0.0
    %999 = vmatpush1.xpose.msra.mxu0 %v749
    %1000 = vmatprep.subr.mxu0 0.0
    %1001 = vmatpush1.xpose.msra.mxu0 %v750
    %1002 = vmatprep.subr.mxu0 0.0
    %1003 = vmatpush1.xpose.msra.mxu0 %v751
    %1004 = vmatprep.subr.mxu0 0.0
    %1005 = vmatpush1.xpose.msra.mxu0 %v752
    %1006 = vmatprep.subr.mxu0 0.0
    %1007 = vmatpush1.xpose.msra.mxu0 %v753
    %1008 = vmatprep.subr.mxu0 0.0
    %1009 = vmatpush1.xpose.msra.mxu0 %v754
    %1010 = vmatprep.subr.mxu0 0.0
    %1011 = vmatpush1.xpose.msra.mxu0 %v755
    %1012 = vmatprep.subr.mxu0 0.0
    %1013 = vmatpush1.xpose.msra.mxu0 %v756
    %1014 = vmatprep.subr.mxu0 0.0
    %1015 = vmatpush1.xpose.msra.mxu0 %v757
    %1016 = vmatprep.subr.mxu0 0.0
    %1017 = vmatpush1.xpose.msra.mxu0 %v758
    %1018 = vmatprep.subr.mxu0 0.0
    %1019 = vmatpush1.xpose.msra.mxu0 %v759
    %1020 = vmatprep.subr.mxu0 0.0
    %1021 = vmatpush1.xpose.msra.mxu0 %v760
    %1022 = vmatprep.subr.mxu0 0.0
    %1023 = vmatpush1.xpose.msra.mxu0 %v761
    %1024 = vmatprep.subr.mxu0 0.0
    %1025 = vmatpush1.xpose.msra.mxu0 %v762
    %1026 = vmatprep.subr.mxu0 0.0
    %1027 = vmatpush1.xpose.msra.mxu0 %v763
    %1028 = vmatprep.subr.mxu0 0.0
    %1029 = vmatpush1.xpose.msra.mxu0 %v764
    %1030 = vmatprep.subr.mxu0 0.0
    %1031 = vmatpush1.xpose.msra.mxu0 %v765
    %1032 = vmatprep.subr.mxu0 0.0
    %1033 = vmatpush1.xpose.msra.mxu0 %v766
    %1034 = vmatprep.subr.mxu0 0.0
    %1035 = vmatpush1.xpose.msra.mxu0 %v767
    %1036 = vmatprep.subr.mxu0 0.0
    %1037 = vmatpush1.xpose.msra.mxu0 %v768
    %1038 = vmatprep.subr.mxu0 0.0
    %1039 = vmatpush1.xpose.msra.mxu0 %v769
    %1040 = vmatprep.subr.mxu0 0.0
    %1041 = vmatpush1.xpose.msra.mxu0 %v770
    %1042 = vmatprep.subr.mxu0 0.0
    %1043 = vmatpush1.xpose.msra.mxu0 %v771
    %1044 = vmatprep.subr.mxu0 0.0
    %1045 = vmatpush1.xpose.msra.mxu0 %v772
    %1046 = vmatprep.subr.mxu0 0.0
    %1047 = vmatpush1.xpose.msra.mxu0 %v773
    %1048 = vmatprep.subr.mxu0 0.0
    %1049 = vmatpush1.xpose.msra.mxu0 %v774
    %1050 = vmatprep.subr.mxu0 0.0
    %1051 = vmatpush1.xpose.msra.mxu0 %v775
    %1052 = vmatprep.subr.mxu0 0.0
    %1053 = vmatpush1.xpose.msra.mxu0 %v776
    %1054 = vmatprep.mubr.f32.mxu0 0.0
    %1055 = vmatmul.mubr.f32.gmra.mrb[0].mxu0 %v648
    %v1056 = vpop.f32.mrb[0].mxu0
    %v1057 = vadd.f32 0.0, %v1056
    %v1058 = vpop.f32.mrb[0].mxu0
    %v1059 = vadd.f32 0.0, %v1058
    %1060 = vdwg.mxu0
    %v1061 = vld [vmem:[#allocation2] sm:$0xff]
    %v1063 = vlaneseq
    %v1064 = vshrl.u32 %v1063, 7
    %v1065 = vsub.s32 0, %v1064
    %v1066 = vrot.slane %v1061, %v1065
    %v1067 = vlaneseq
    %v1068 = vshrl.u32 %v1067, 7
    %v1069 = vsub.s32 1, %v1068
    %v1070 = vrot.slane %v1061, %v1069
    %v1071 = vlaneseq
    %v1072 = vshrl.u32 %v1071, 7
    %v1073 = vsub.s32 2, %v1072
    %v1074 = vrot.slane %v1061, %v1073
    %v1075 = vlaneseq
    %v1076 = vshrl.u32 %v1075, 7
    %v1077 = vsub.s32 3, %v1076
    %v1078 = vrot.slane %v1061, %v1077
    %v1079 = vlaneseq
    %v1080 = vshrl.u32 %v1079, 7
    %v1081 = vsub.s32 4, %v1080
    %v1082 = vrot.slane %v1061, %v1081
    %v1083 = vlaneseq
    %v1084 = vshrl.u32 %v1083, 7
    %v1085 = vsub.s32 5, %v1084
    %v1086 = vrot.slane %v1061, %v1085
    %v1087 = vlaneseq
    %v1088 = vshrl.u32 %v1087, 7
    %v1089 = vsub.s32 6, %v1088
    %v1090 = vrot.slane %v1061, %v1089
    %v1091 = vlaneseq
    %v1092 = vshrl.u32 %v1091, 7
    %v1093 = vsub.s32 7, %v1092
    %v1094 = vrot.slane %v1061, %v1093
    %v1103 = vmul.f32 %v844, %v1066
    %v1104 = vmul.f32 %v846, %v1070
    %v1105 = vmul.f32 %v915, %v1074
    %v1106 = vmul.f32 %v917, %v1078
    %v1107 = vmul.f32 %v986, %v1082
    %v1108 = vmul.f32 %v988, %v1086
    %v1109 = vmul.f32 %v1057, %v1090
    %v1110 = vmul.f32 %v1059, %v1094
    %v1111 = vmax.f32 %v1103, -1.0
    %v1112 = vmax.f32 %v1104, -1.0
    %v1113 = vmax.f32 %v1105, -1.0
    %v1114 = vmax.f32 %v1106, -1.0
    %v1115 = vmax.f32 %v1107, -1.0
    %v1116 = vmax.f32 %v1108, -1.0
    %v1117 = vmax.f32 %v1109, -1.0
    %v1118 = vmax.f32 %v1110, -1.0
    %v1119 = vmin.f32 %v1111, 1.0
    %v1120 = vmin.f32 %v1112, 1.0
    %v1121 = vmin.f32 %v1113, 1.0
    %v1122 = vmin.f32 %v1114, 1.0
    %v1123 = vmin.f32 %v1115, 1.0
    %v1124 = vmin.f32 %v1116, 1.0
    %v1125 = vmin.f32 %v1117, 1.0
    %v1126 = vmin.f32 %v1118, 1.0
    %v1127 = vld [vmem:[%s0] sm:$0xff]
    %v1128 = vcvt.f32.s32.to.zero.pseudo %v1127
    %s1129 = smul.u32 0, 1024
    %v1130 = vlaneseq
    %v1131 = vand.u32 %v1130, 127
    %v1132 = vadd.s32 %v1131, 128
    %v1133 = vadd.s32 %v1131, 256
    %v1134 = vadd.s32 %v1131, 384
    %v1135 = vadd.s32 %v1131, 512
    %v1136 = vadd.s32 %v1131, 640
    %v1137 = vadd.s32 %v1131, 768
    %v1138 = vadd.s32 %v1131, 896
    %v1139 = vstv %s1129
    %v1140 = vadd.s32 %v1139, %v1131
    %v1141 = vadd.s32 %v1139, %v1132
    %v1142 = vadd.s32 %v1139, %v1133
    %v1143 = vadd.s32 %v1139, %v1134
    %v1144 = vadd.s32 %v1139, %v1135
    %v1145 = vadd.s32 %v1139, %v1136
    %v1146 = vadd.s32 %v1139, %v1137
    %v1147 = vadd.s32 %v1139, %v1138
    %1148 = vset.pattern.permute.xlu0 0
    %1149 = vperm.xlu0 %1148, %v1128
    %v1150 = vpop.permute.xlu0 %1149
    %vm1151 = vcmp.eq.s32.totalorder %v1150, %v1140
    %vm1152 = vcmp.eq.s32.totalorder %v1150, %v1141
    %vm1153 = vcmp.eq.s32.totalorder %v1150, %v1142
    %vm1154 = vcmp.eq.s32.totalorder %v1150, %v1143
    %vm1155 = vcmp.eq.s32.totalorder %v1150, %v1144
    %vm1156 = vcmp.eq.s32.totalorder %v1150, %v1145
    %vm1157 = vcmp.eq.s32.totalorder %v1150, %v1146
    %vm1158 = vcmp.eq.s32.totalorder %v1150, %v1147
    %1160 = vset.pattern.permute.xlu0 3
    %1161 = vperm.xlu0 %1160, %v1127
    %v1162 = vpop.permute.xlu0 %1161
    %v1164 = vadd.f32 %v1162, %v1119
    %v1165 = vadd.f32 %v1162, %v1120
    %v1166 = vadd.f32 %v1162, %v1121
    %v1167 = vadd.f32 %v1162, %v1122
    %v1168 = vadd.f32 %v1162, %v1123
    %v1169 = vadd.f32 %v1162, %v1124
    %v1170 = vadd.f32 %v1162, %v1125
    %v1171 = vadd.f32 %v1162, %v1126
    %v1172 = vmul.f32 %v1119, %v1164
    %v1173 = vmul.f32 %v1120, %v1165
    %v1174 = vmul.f32 %v1121, %v1166
    %v1175 = vmul.f32 %v1122, %v1167
    %v1176 = vmul.f32 %v1123, %v1168
    %v1177 = vmul.f32 %v1124, %v1169
    %v1178 = vmul.f32 %v1125, %v1170
    %v1179 = vmul.f32 %v1126, %v1171
    %1180 = vset.pattern.permute.xlu0 1
    %1181 = vperm.xlu0 %1180, %v1127
    %v1182 = vpop.permute.xlu0 %1181
    %vm1184 = vcmp.gt.f32.partialorder %v1119, %v1182
    %vm1185 = vcmp.gt.f32.partialorder %v1120, %v1182
    %vm1186 = vcmp.gt.f32.partialorder %v1121, %v1182
    %vm1187 = vcmp.gt.f32.partialorder %v1122, %v1182
    %vm1188 = vcmp.gt.f32.partialorder %v1123, %v1182
    %vm1189 = vcmp.gt.f32.partialorder %v1124, %v1182
    %vm1190 = vcmp.gt.f32.partialorder %v1125, %v1182
    %vm1191 = vcmp.gt.f32.partialorder %v1126, %v1182
    %v1192 = vsel %vm1184, %v1172, %v1119
    %v1193 = vsel %vm1185, %v1173, %v1120
    %v1194 = vsel %vm1186, %v1174, %v1121
    %v1195 = vsel %vm1187, %v1175, %v1122
    %v1196 = vsel %vm1188, %v1176, %v1123
    %v1197 = vsel %vm1189, %v1177, %v1124
    %v1198 = vsel %vm1190, %v1178, %v1125
    %v1199 = vsel %vm1191, %v1179, %v1126
    %1200 = vset.pattern.permute.xlu0 2
    %1201 = vperm.xlu0 %1200, %v1127
    %v1202 = vpop.permute.xlu0 %1201
    %v1204 = vsel %vm1151, %v1202, %v1192
    %v1205 = vsel %vm1152, %v1202, %v1193
    %v1206 = vsel %vm1153, %v1202, %v1194
    %v1207 = vsel %vm1154, %v1202, %v1195
    %v1208 = vsel %vm1155, %v1202, %v1196
    %v1209 = vsel %vm1156, %v1202, %v1197
    %v1210 = vsel %vm1157, %v1202, %v1198
    %v1211 = vsel %vm1158, %v1202, %v1199
    %v1212 = vmul.f32 %v1204, 64.0
    %v1213 = vmul.f32 %v1205, 64.0
    %v1214 = vmul.f32 %v1206, 64.0
    %v1215 = vmul.f32 %v1207, 64.0
    %v1216 = vmul.f32 %v1208, 64.0
    %v1217 = vmul.f32 %v1209, 64.0
    %v1218 = vmul.f32 %v1210, 64.0
    %v1219 = vmul.f32 %v1211, 64.0
    %1220 = vst [vmem:[#allocation6] sm:$0xff] %v1212
    %1221 = vst [vmem:[#allocation6 + $0x8] sm:$0xff] %v1213
    %1222 = vst [vmem:[#allocation6 + $0x10] sm:$0xff] %v1214
    %1223 = vst [vmem:[#allocation6 + $0x18] sm:$0xff] %v1215
    %1224 = vst [vmem:[#allocation6 + $0x20] sm:$0xff] %v1216
    %1225 = vst [vmem:[#allocation6 + $0x28] sm:$0xff] %v1217
    %1226 = vst [vmem:[#allocation6 + $0x30] sm:$0xff] %v1218
    %1227 = vst [vmem:[#allocation6 + $0x38] sm:$0xff] %v1219
    // Predicated region
    $region22: #{tpu_custom_call.1} parent=1 // pred_check
      _
    $region23: #{tpu_custom_call.1} parent=1 // pred_check_branch
      %1229 = sbr.rel (0) target = $region25
    $region24: #{tpu_custom_call.1} parent=1 // pred_region
      %s1231 = ssub.s32 1024, 1024
      %1232 = vsyncadd [#allocation5], %s1231
      %s1234 = sshll.u32 [#allocation6], 4
      %s1235 = int_to_ptr.vmem [resolvable:$true] %s1234
      %1237 = dma.vmem_to_hbm [thread:$0]  %s1235, 1024, %s3, [#allocation5]
    $region25: #{tpu_custom_call.1} parent=1 // pred_fallthru
      _
    // Predicated region
    $region26: #{tpu_custom_call.1} parent=1 // pred_check
      _
    $region27: #{tpu_custom_call.1} parent=1 // pred_check_branch
      %1239 = sbr.rel (0) target = $region29
    $region28: #{tpu_custom_call.1} parent=1 // pred_region
      %1240 = dma.done [#allocation5], 1024
    $region29: #{tpu_custom_call.1} parent=1 // pred_fallthru
      _
    %1241 = vsyncpa [#allocation4], 1
    %1242 = vsyncpa [#allocation5], 1

</llo_original>
